<compile_context>
chip_gen: v7x
topology: tpu7x:2x2x1
jax: 0.10.0
libtpu: 0.0.40
codegen_flags: <defaults>
</compile_context>

<pallas_src>
from functools import partial

import jax
import jax.numpy as jnp
from jax import lax
from jax.experimental import pallas as pl
from jax.experimental.pallas import tpu as pltpu

LEAKY_SLOPE = 0.001
EPS = 1e-5


# ---------------------------------------------------------------------------
# Fused Bottleneck kernel (one image per grid step)
# ---------------------------------------------------------------------------
def _bottleneck_kernel(
    x_ref, w1_ref, s1_ref, b1_ref,
    w2_ref, s2_ref, b2_ref,
    sew1_ref, seb1_ref, sew2_ref, seb2_ref,
    w3_ref, s3_ref, b3_ref,
    o_ref,
    y1cat_ref, y2_ref,
    *, H, W, PADR,
):
    HW = H * W
    P = w1_ref.shape[1]
    bf16 = jnp.bfloat16

    # ---- load the input tile once; the f32 copy doubles as the residual -----
    x_f32 = x_ref[0]                                   # (HW, Cin) f32
    x_b = x_f32.astype(bf16)

    # ---- conv1: 1x1 + folded ABN + leaky_relu(0.001) -------------------------
    y1 = jnp.dot(x_b, w1_ref[...], preferred_element_type=jnp.float32)
    y1 = y1 * s1_ref[...] + b1_ref[...]
    y1 = jnp.where(y1 >= 0.0, y1, LEAKY_SLOPE * y1)    # (HW, P) f32

    # ---- build [left | center | right] dx-shifted, column-masked concat ------
    # left[p]  = y1[p-1] (0 at the left image border),
    # right[p] = y1[p+1] (0 at the right image border).
    # The dx masks are applied ONCE here instead of once per 3x3 tap, and the
    # f32->bf16 cast happens at a single site on the concatenated operand.
    col = lax.broadcasted_iota(jnp.int32, (HW, 1), 0) % W
    zrow = jnp.zeros((1, P), jnp.float32)
    left = jnp.where(col > 0, jnp.concatenate([zrow, y1[:-1, :]], axis=0), 0.0)
    right = jnp.where(col < W - 1, jnp.concatenate([y1[1:, :], zrow], axis=0), 0.0)
    cat = jnp.concatenate([left, y1, right], axis=1).astype(bf16)   # (HW, 3P)

    # ---- stage into the zero-row-haloed bf16 scratch --------------------------
    # Only the W halo rows actually read on each side are (re)zeroed each step:
    # cheap, and keeps the kernel correct when the batch grid is sharded across
    # megacore TensorCores (scratch is per-core).
    halo = jnp.zeros((W, 3 * P), bf16)
    y1cat_ref[pl.ds(PADR - W, W), :] = halo
    y1cat_ref[pl.ds(PADR + HW, W), :] = halo
    y1cat_ref[pl.ds(PADR, HW), :] = cat

    # ---- conv2: 3x3 stride-1 SAME as 3 MXU matmuls with K = 3P ----------------
    # One matmul per kernel row; row windows are contiguous slices of the haloed
    # scratch.  Accumulation is carried as a value (no VMEM read-modify-write).
    acc = jnp.dot(y1cat_ref[pl.ds(PADR - W, HW), :], w2_ref[0],
                  preferred_element_type=jnp.float32)
    acc = acc + jnp.dot(cat, w2_ref[1], preferred_element_type=jnp.float32)
    acc = acc + jnp.dot(y1cat_ref[pl.ds(PADR + W, HW), :], w2_ref[2],
                        preferred_element_type=jnp.float32)

    y2 = acc * s2_ref[...] + b2_ref[...]
    y2 = jnp.where(y2 >= 0.0, y2, LEAKY_SLOPE * y2)    # (HW, P) f32

    # ---- SE: pool consumes y2 now; stage y2 so it is not live across SE ------
    pooled = jnp.mean(y2, axis=0, keepdims=True)        # (1, P)
    y2_ref[...] = y2

    h1 = jnp.dot(pooled, sew1_ref[...],
                 preferred_element_type=jnp.float32) + seb1_ref[...]
    h1 = jnp.maximum(h1, 0.0)
    z = jnp.dot(h1, sew2_ref[...],
                preferred_element_type=jnp.float32) + seb2_ref[...]
    gate = 1.0 / (1.0 + jnp.exp(-z))                     # (1, P)

    # ---- conv3: 1x1 identity ABN, fused SE gate + residual add + ReLU --------
    y2g = (y2_ref[...] * gate).astype(bf16)
    y3 = jnp.dot(y2g, w3_ref[...], preferred_element_type=jnp.float32)
    y3 = y3 * s3_ref[...] + b3_ref[...] + x_f32          # Cin == Cout
    o_ref[0] = jnp.maximum(y3, 0.0)


# ---------------------------------------------------------------------------
# Wrapper (pallas_call plumbing) — channels-last entry point
# ---------------------------------------------------------------------------
def bottleneck_forward_nhwc(x_nhwc, p):
    N, H, W, Cin = x_nhwc.shape
    P = p["w1"].shape[1]
    R = p["se_w1"].shape[1]
    Cout = p["w3"].shape[1]
    # downsample is None -> the residual add requires matching channels.
    assert Cin == Cout, "stride-1 / no-downsample Bottleneck needs Cin == Cout"

    HW = H * W
    PADR = ((W + 7) // 8) * 8            # row halo (>= W), sublane-aligned

    bf16 = jnp.bfloat16
    w1 = p["w1"].astype(bf16)                          # (Cin, P)
    w2 = p["w2"].reshape(3, 3 * P, P).astype(bf16)     # (3,3,P,P) -> (3, 3P, P)
    w3 = p["w3"].astype(bf16)                          # (P, Cout)
    s1, b1 = p["s1"].reshape(1, P), p["b1"].reshape(1, P)
    s2, b2 = p["s2"].reshape(1, P), p["b2"].reshape(1, P)
    s3, b3 = p["s3"].reshape(1, Cout), p["b3"].reshape(1, Cout)
    sew1, seb1 = p["se_w1"], p["se_b1"].reshape(1, R)
    sew2, seb2 = p["se_w2"], p["se_b2"].reshape(1, P)

    # Free, contiguous reshapes: present (1, HW, C) blocks so the kernel's working
    # layout matches the DMA'd block exactly (no W->sublane padding, no relayout).
    x_flat = x_nhwc.reshape(N, HW, Cin)

    rep2 = lambda n: (0, 0)
    rep3 = lambda n: (0, 0, 0)
    kernel = partial(_bottleneck_kernel, H=H, W=W, PADR=PADR)

    # Explicit VMEM budget from the real per-step footprint (double-buffered
    # x/out blocks + double-buffered weights + scratches), 2x headroom, capped
    # at v7x's 64 MiB physical VMEM.
    weight_bytes = ((w1.size + w2.size + w3.size) * 2
                    + (sew1.size + seb1.size + sew2.size + seb2.size) * 4
                    + 2 * (s1.size + s2.size + s3.size) * 4)
    foot = (2 * HW * Cin * 4                 # double-buffered input block
            + 2 * HW * Cout * 4              # double-buffered output block
            + 2 * weight_bytes               # weights double-buffered by default
            + (HW + 2 * PADR) * 3 * P * 2    # y1cat scratch (bf16)
            + HW * P * 4)                    # y2 scratch (f32)
    vmem_limit = int(min(64 * 2 ** 20, max(16 * 2 ** 20, 2 * foot)))

    out_flat = pl.pallas_call(
        kernel,
        grid=(N,),
        in_specs=[
            pl.BlockSpec((1, HW, Cin), lambda n: (n, 0, 0)),    # x (flattened)
            pl.BlockSpec((Cin, P), rep2),                       # w1
            pl.BlockSpec((1, P), rep2),                         # s1
            pl.BlockSpec((1, P), rep2),                         # b1
            pl.BlockSpec((3, 3 * P, P), rep3),                  # w2 (per-row, K=3P)
            pl.BlockSpec((1, P), rep2),                         # s2
            pl.BlockSpec((1, P), rep2),                         # b2
            pl.BlockSpec((P, R), rep2),                         # se_w1
            pl.BlockSpec((1, R), rep2),                         # se_b1
            pl.BlockSpec((R, P), rep2),                         # se_w2
            pl.BlockSpec((1, P), rep2),                         # se_b2
            pl.BlockSpec((P, Cout), rep2),                      # w3
            pl.BlockSpec((1, Cout), rep2),                      # s3
            pl.BlockSpec((1, Cout), rep2),                      # b3
        ],
        out_specs=pl.BlockSpec((1, HW, Cout), lambda n: (n, 0, 0)),
        out_shape=jax.ShapeDtypeStruct((N, HW, Cout), jnp.float32),
        scratch_shapes=[
            pltpu.VMEM((HW + 2 * PADR, 3 * P), jnp.bfloat16),   # haloed conv2 operand
            pltpu.VMEM((HW, P), jnp.float32),                   # y2 staging
        ],
        compiler_params=pltpu.CompilerParams(
            dimension_semantics=("parallel",),
            vmem_limit_bytes=vmem_limit),
    )(x_flat, w1, s1, b1, w2, s2, b2, sew1, seb1, sew2, seb2, w3, s3, b3)

    return out_flat.reshape(N, H, W, Cout)


def bottleneck_forward(x_nchw, p):
    # Interface parity with the PyTorch module only.  A full TResNet should stay
    # channels-last and call bottleneck_forward_nhwc directly (these transposes
    # are full-tensor HBM passes that should be hoisted out of the per-block path).
    x = jnp.transpose(x_nchw, (0, 2, 3, 1))          # NCHW -> NHWC
    out = bottleneck_forward_nhwc(x, p)
    return jnp.transpose(out, (0, 3, 1, 2))          # NHWC -> NCHW


# ---------------------------------------------------------------------------
# Deterministic parameter init + pure-JAX reference
# ---------------------------------------------------------------------------
def init_params(key, inplanes, planes, expansion=4):
    outplanes = planes * expansion
    reduce_ch = max(outplanes // 8, 64)
    keys = iter(jax.random.split(key, 32))

    def q(w):   # weights shipped to the kernel in bf16 -> keep them bf16-exact
        return w.astype(jnp.bfloat16).astype(jnp.float32)

    def conv_w(cin, cout, kh, kw):
        fan_in = cin * kh * kw
        w = jax.random.normal(next(keys), (kh, kw, cin, cout), jnp.float32)
        return q(w * (2.0 / fan_in) ** 0.5)

    def abn(c):
        gamma = 1.0 + 0.1 * jax.random.normal(next(keys), (c,), jnp.float32)
        beta = 0.1 * jax.random.normal(next(keys), (c,), jnp.float32)
        mean = 0.1 * jax.random.normal(next(keys), (c,), jnp.float32)
        var = 1.0 + 0.5 * jax.random.uniform(next(keys), (c,), jnp.float32)
        scale = gamma * lax.rsqrt(var + EPS)
        bias = beta - mean * scale
        return scale, bias

    w1_hwio = conv_w(inplanes, planes, 1, 1)
    s1, b1 = abn(planes)
    w2_hwio = conv_w(planes, planes, 3, 3)
    s2, b2 = abn(planes)
    w3_hwio = conv_w(planes, outplanes, 1, 1)
    s3, b3 = abn(outplanes)

    se_w1 = jax.random.normal(next(keys), (planes, reduce_ch), jnp.float32) * (2.0 / planes) ** 0.5
    se_b1 = 0.05 * jax.random.normal(next(keys), (reduce_ch,), jnp.float32)
    se_w2 = jax.random.normal(next(keys), (reduce_ch, planes), jnp.float32) * (2.0 / reduce_ch) ** 0.5
    se_b2 = 0.05 * jax.random.normal(next(keys), (planes,), jnp.float32)

    return {
        "w1": w1_hwio.reshape(inplanes, planes), "w1_hwio": w1_hwio, "s1": s1, "b1": b1,
        "w2": w2_hwio, "w2_hwio": w2_hwio, "s2": s2, "b2": b2,
        "w3": w3_hwio.reshape(planes, outplanes), "w3_hwio": w3_hwio, "s3": s3, "b3": b3,
        "se_w1": se_w1, "se_b1": se_b1, "se_w2": se_w2, "se_b2": se_b2,
    }


def reference_forward(x_nchw, p):
    x = jnp.transpose(x_nchw, (0, 2, 3, 1))
    dn = ("NHWC", "HWIO", "NHWC")
    prec = lax.Precision.HIGHEST

    def leaky(y):
        return jnp.where(y >= 0.0, y, LEAKY_SLOPE * y)

    y = lax.conv_general_dilated(x, p["w1_hwio"], (1, 1), "VALID",
                                 dimension_numbers=dn, precision=prec)
    y = leaky(y * p["s1"] + p["b1"])
    y = lax.conv_general_dilated(y, p["w2_hwio"], (1, 1), ((1, 1), (1, 1)),
                                 dimension_numbers=dn, precision=prec)
    y = leaky(y * p["s2"] + p["b2"])
    pooled = jnp.mean(y, axis=(1, 2), keepdims=True)
    h = jnp.maximum(jnp.einsum("nijc,cr->nijr", pooled, p["se_w1"],
                               precision=prec) + p["se_b1"], 0.0)
    gate = jax.nn.sigmoid(jnp.einsum("nijr,rc->nijc", h, p["se_w2"],
                                     precision=prec) + p["se_b2"])
    y = y * gate
    y = lax.conv_general_dilated(y, p["w3_hwio"], (1, 1), "VALID",
                                 dimension_numbers=dn, precision=prec)
    y = y * p["s3"] + p["b3"]
    out = jnp.maximum(y + x, 0.0)
    return jnp.transpose(out, (0, 3, 1, 2))


if __name__ == "__main__":
    key = jax.random.PRNGKey(0)
    kx, kp = jax.random.split(key)

    # Small shapes: inplanes must equal planes * expansion (downsample is None).
    N, inplanes, planes, H, W = 2, 64, 16, 8, 8
    x = jax.random.normal(kx, (N, inplanes, H, W), jnp.float32)   # NCHW (PyTorch-style)
    params = init_params(kp, inplanes, planes)

    out = jax.block_until_ready(bottleneck_forward(x, params))
    ref = jax.block_until_ready(reference_forward(x, params))

    assert out.shape == (N, planes * 4, H, W)
    # Tolerance widened from the f32 2e-3 because the kernel feeds the MXU with
    # bf16 activations (f32 accumulation / epilogues; weights are bf16-exact).
    assert jnp.allclose(out, ref, rtol=3e-2, atol=3e-2), float(jnp.max(jnp.abs(out - ref)))

    print("KERNEL_OK")
</pallas_src>

<mosaic_0001>
module attributes {stable_mosaic.version = 11 : i64} {
  func.func @_bottleneck_kernel(%arg0: i32, %arg1: memref<1x64x64xf32, #tpu.memory_space<vmem>>, %arg2: memref<64x16xbf16, #tpu.memory_space<vmem>>, %arg3: memref<1x16xf32, #tpu.memory_space<vmem>>, %arg4: memref<1x16xf32, #tpu.memory_space<vmem>>, %arg5: memref<3x48x16xbf16, #tpu.memory_space<vmem>>, %arg6: memref<1x16xf32, #tpu.memory_space<vmem>>, %arg7: memref<1x16xf32, #tpu.memory_space<vmem>>, %arg8: memref<16x64xf32, #tpu.memory_space<vmem>>, %arg9: memref<1x64xf32, #tpu.memory_space<vmem>>, %arg10: memref<64x16xf32, #tpu.memory_space<vmem>>, %arg11: memref<1x16xf32, #tpu.memory_space<vmem>>, %arg12: memref<16x64xbf16, #tpu.memory_space<vmem>>, %arg13: memref<1x64xf32, #tpu.memory_space<vmem>>, %arg14: memref<1x64xf32, #tpu.memory_space<vmem>>, %arg15: memref<1x64x64xf32, #tpu.memory_space<vmem>>, %arg16: memref<80x48xbf16, #tpu.memory_space<vmem>>, %arg17: memref<64x16xf32, #tpu.memory_space<vmem>>) attributes {dimension_semantics = [#tpu.dimension_semantics<parallel>], iteration_bounds = array<i64: 2>, scalar_prefetch = 0 : i64, scratch_operands = 2 : i64, tpu.core_type = #tpu.core_type<tc>, window_params = [{transform_indices = @transform_0, window_bounds = array<i64: 1, 64, 64>}, {pipeline_mode = #tpu.pipeline_mode<synchronous>, transform_indices = @transform_1, window_bounds = array<i64: 64, 16>}, {pipeline_mode = #tpu.pipeline_mode<synchronous>, transform_indices = @transform_2, window_bounds = array<i64: 1, 16>}, {pipeline_mode = #tpu.pipeline_mode<synchronous>, transform_indices = @transform_3, window_bounds = array<i64: 1, 16>}, {pipeline_mode = #tpu.pipeline_mode<synchronous>, transform_indices = @transform_4, window_bounds = array<i64: 3, 48, 16>}, {pipeline_mode = #tpu.pipeline_mode<synchronous>, transform_indices = @transform_5, window_bounds = array<i64: 1, 16>}, {pipeline_mode = #tpu.pipeline_mode<synchronous>, transform_indices = @transform_6, window_bounds = array<i64: 1, 16>}, {pipeline_mode = #tpu.pipeline_mode<synchronous>, transform_indices = @transform_7, window_bounds = array<i64: 16, 64>}, {pipeline_mode = #tpu.pipeline_mode<synchronous>, transform_indices = @transform_8, window_bounds = array<i64: 1, 64>}, {pipeline_mode = #tpu.pipeline_mode<synchronous>, transform_indices = @transform_9, window_bounds = array<i64: 64, 16>}, {pipeline_mode = #tpu.pipeline_mode<synchronous>, transform_indices = @transform_10, window_bounds = array<i64: 1, 16>}, {pipeline_mode = #tpu.pipeline_mode<synchronous>, transform_indices = @transform_11, window_bounds = array<i64: 16, 64>}, {pipeline_mode = #tpu.pipeline_mode<synchronous>, transform_indices = @transform_12, window_bounds = array<i64: 1, 64>}, {pipeline_mode = #tpu.pipeline_mode<synchronous>, transform_indices = @transform_13, window_bounds = array<i64: 1, 64>}, {transform_indices = @transform_14, window_bounds = array<i64: 1, 64, 64>}]} {
    %c0 = arith.constant 0 : index
    %c0_0 = arith.constant 0 : index
    %c0_1 = arith.constant 0 : index
    %0 = vector.load %arg1[%c0, %c0_0, %c0_1] : memref<1x64x64xf32, #tpu.memory_space<vmem>>, vector<1x64x64xf32>
    %1 = vector.shape_cast %0 : vector<1x64x64xf32> to vector<64x64xf32>
    %2 = arith.truncf %1 : vector<64x64xf32> to vector<64x64xbf16>
    %c0_2 = arith.constant 0 : index
    %c0_3 = arith.constant 0 : index
    %3 = vector.load %arg2[%c0_2, %c0_3] : memref<64x16xbf16, #tpu.memory_space<vmem>>, vector<64x16xbf16>
    %cst = arith.constant dense<0.000000e+00> : vector<64x16xf32>
    %4 = tpu.matmul %2, %3, %cst {dimension_numbers = #tpu.dot_dimension_numbers<[1], [0], [0], [1], [0, 0, 1, 1], [], []>} : vector<64x64xbf16>, vector<64x16xbf16>, vector<64x16xf32> -> vector<64x16xf32>
    %c0_4 = arith.constant 0 : index
    %c0_5 = arith.constant 0 : index
    %5 = vector.load %arg3[%c0_4, %c0_5] : memref<1x16xf32, #tpu.memory_space<vmem>>, vector<1x16xf32>
    %6 = vector.broadcast %5 : vector<1x16xf32> to vector<64x16xf32>
    %7 = arith.mulf %4, %6 : vector<64x16xf32>
    %c0_6 = arith.constant 0 : index
    %c0_7 = arith.constant 0 : index
    %8 = vector.load %arg4[%c0_6, %c0_7] : memref<1x16xf32, #tpu.memory_space<vmem>>, vector<1x16xf32>
    %9 = vector.broadcast %8 : vector<1x16xf32> to vector<64x16xf32>
    %10 = arith.addf %7, %9 : vector<64x16xf32>
    %cst_8 = arith.constant 0.000000e+00 : f32
    %11 = vector.broadcast %cst_8 : f32 to vector<64x16xf32>
    %12 = arith.cmpf oge, %10, %11 : vector<64x16xf32>
    %cst_9 = arith.constant 1.000000e-03 : f32
    %13 = vector.broadcast %cst_9 : f32 to vector<64x16xf32>
    %14 = arith.mulf %13, %10 : vector<64x16xf32>
    %15 = arith.select %12, %10, %14 : vector<64x16xi1>, vector<64x16xf32>
    %16 = tpu.iota {dimensions = array<i32: 0>} : vector<64x1xi32>
    %c8_i32 = arith.constant 8 : i32
    %c0_i32 = arith.constant 0 : i32
    %17 = arith.cmpi eq, %c8_i32, %c0_i32 : i32
    %c1_i32 = arith.constant 1 : i32
    %18 = arith.select %17, %c1_i32, %c8_i32 : i32
    %19 = vector.broadcast %18 : i32 to vector<64x1xi32>
    %20 = arith.remsi %16, %19 : vector<64x1xi32>
    %c0_i32_10 = arith.constant 0 : i32
    %21 = vector.broadcast %c0_i32_10 : i32 to vector<64x1xi32>
    %22 = arith.cmpi ne, %20, %21 : vector<64x1xi32>
    %c0_i32_11 = arith.constant 0 : i32
    %23 = vector.broadcast %c0_i32_11 : i32 to vector<64x1xi32>
    %24 = arith.cmpi slt, %20, %23 : vector<64x1xi32>
    %c0_i32_12 = arith.constant 0 : i32
    %25 = arith.cmpi slt, %18, %c0_i32_12 : i32
    %26 = vector.broadcast %25 : i1 to vector<64x1xi1>
    %27 = vector.broadcast %26 : vector<64x1xi1> to vector<64x1xi1>
    %28 = arith.xori %24, %27 : vector<64x1xi1>
    %29 = arith.andi %28, %22 : vector<64x1xi1>
    %30 = vector.broadcast %18 : i32 to vector<64x1xi32>
    %31 = arith.addi %20, %30 : vector<64x1xi32>
    %32 = arith.select %29, %31, %20 : vector<64x1xi1>, vector<64x1xi32>
    %cst_13 = arith.constant 0.000000e+00 : f32
    %33 = vector.broadcast %cst_13 : f32 to vector<1x16xf32>
    %c0_i32_14 = arith.constant 0 : i32
    %34 = vector.broadcast %c0_i32_14 : i32 to vector<64x1xi32>
    %35 = arith.cmpi sgt, %32, %34 : vector<64x1xi32>
    %36 = vector.extract_strided_slice %15 {offsets = [0, 0], sizes = [63, 16], strides = [1, 1]} : vector<64x16xf32> to vector<63x16xf32>
    %37 = tpu.concatenate %33, %36 in 0 : vector<1x16xf32>, vector<63x16xf32> -> vector<64x16xf32>
    %cst_15 = arith.constant 0.000000e+00 : f32
    %38 = vector.shape_cast %35 : vector<64x1xi1> to vector<64x1xi1>
    %39 = vector.broadcast %38 : vector<64x1xi1> to vector<64x16xi1>
    %40 = vector.broadcast %cst_15 : f32 to vector<64x16xf32>
    %41 = arith.select %39, %37, %40 : vector<64x16xi1>, vector<64x16xf32>
    %c7_i32 = arith.constant 7 : i32
    %42 = vector.broadcast %c7_i32 : i32 to vector<64x1xi32>
    %43 = arith.cmpi slt, %32, %42 : vector<64x1xi32>
    %44 = vector.extract_strided_slice %15 {offsets = [1, 0], sizes = [63, 16], strides = [1, 1]} : vector<64x16xf32> to vector<63x16xf32>
    %45 = tpu.concatenate %44, %33 in 0 : vector<63x16xf32>, vector<1x16xf32> -> vector<64x16xf32>
    %cst_16 = arith.constant 0.000000e+00 : f32
    %46 = vector.shape_cast %43 : vector<64x1xi1> to vector<64x1xi1>
    %47 = vector.broadcast %46 : vector<64x1xi1> to vector<64x16xi1>
    %48 = vector.broadcast %cst_16 : f32 to vector<64x16xf32>
    %49 = arith.select %47, %45, %48 : vector<64x16xi1>, vector<64x16xf32>
    %50 = tpu.concatenate %41, %15, %49 in 1 : vector<64x16xf32>, vector<64x16xf32>, vector<64x16xf32> -> vector<64x48xf32>
    %51 = arith.truncf %50 : vector<64x48xf32> to vector<64x48xbf16>
    %cst_17 = arith.constant 0.000000e+00 : bf16
    %52 = vector.broadcast %cst_17 : bf16 to vector<8x48xbf16>
    %c0_18 = arith.constant 0 : index
    %c0_19 = arith.constant 0 : index
    %53 = vector.load %arg16[%c0_18, %c0_19] : memref<80x48xbf16, #tpu.memory_space<vmem>>, vector<8x48xbf16>
    tpu.vector_store %arg16[%c0_18, %c0_19], %52 {strides = array<i32>} : memref<80x48xbf16, #tpu.memory_space<vmem>>, vector<8x48xbf16>,
    %c72 = arith.constant 72 : index
    %c0_20 = arith.constant 0 : index
    %54 = vector.load %arg16[%c72, %c0_20] : memref<80x48xbf16, #tpu.memory_space<vmem>>, vector<8x48xbf16>
    tpu.vector_store %arg16[%c72, %c0_20], %52 {strides = array<i32>} : memref<80x48xbf16, #tpu.memory_space<vmem>>, vector<8x48xbf16>,
    %c8 = arith.constant 8 : index
    %c0_21 = arith.constant 0 : index
    %55 = vector.load %arg16[%c8, %c0_21] : memref<80x48xbf16, #tpu.memory_space<vmem>>, vector<64x48xbf16>
    tpu.vector_store %arg16[%c8, %c0_21], %51 {strides = array<i32>} : memref<80x48xbf16, #tpu.memory_space<vmem>>, vector<64x48xbf16>,
    %c0_22 = arith.constant 0 : index
    %c0_23 = arith.constant 0 : index
    %56 = vector.load %arg16[%c0_22, %c0_23] : memref<80x48xbf16, #tpu.memory_space<vmem>>, vector<64x48xbf16>
    %c0_24 = arith.constant 0 : index
    %c0_25 = arith.constant 0 : index
    %c0_26 = arith.constant 0 : index
    %57 = vector.load %arg5[%c0_24, %c0_25, %c0_26] : memref<3x48x16xbf16, #tpu.memory_space<vmem>>, vector<1x48x16xbf16>
    %58 = vector.shape_cast %57 : vector<1x48x16xbf16> to vector<48x16xbf16>
    %cst_27 = arith.constant dense<0.000000e+00> : vector<64x16xf32>
    %59 = tpu.matmul %56, %58, %cst_27 {dimension_numbers = #tpu.dot_dimension_numbers<[1], [0], [0], [1], [0, 0, 1, 1], [], []>} : vector<64x48xbf16>, vector<48x16xbf16>, vector<64x16xf32> -> vector<64x16xf32>
    %c1 = arith.constant 1 : index
    %c0_28 = arith.constant 0 : index
    %c0_29 = arith.constant 0 : index
    %60 = vector.load %arg5[%c1, %c0_28, %c0_29] : memref<3x48x16xbf16, #tpu.memory_space<vmem>>, vector<1x48x16xbf16>
    %61 = vector.shape_cast %60 : vector<1x48x16xbf16> to vector<48x16xbf16>
    %cst_30 = arith.constant dense<0.000000e+00> : vector<64x16xf32>
    %62 = tpu.matmul %51, %61, %cst_30 {dimension_numbers = #tpu.dot_dimension_numbers<[1], [0], [0], [1], [0, 0, 1, 1], [], []>} : vector<64x48xbf16>, vector<48x16xbf16>, vector<64x16xf32> -> vector<64x16xf32>
    %63 = arith.addf %59, %62 : vector<64x16xf32>
    %c16 = arith.constant 16 : index
    %c0_31 = arith.constant 0 : index
    %64 = vector.load %arg16[%c16, %c0_31] : memref<80x48xbf16, #tpu.memory_space<vmem>>, vector<64x48xbf16>
    %c2 = arith.constant 2 : index
    %c0_32 = arith.constant 0 : index
    %c0_33 = arith.constant 0 : index
    %65 = vector.load %arg5[%c2, %c0_32, %c0_33] : memref<3x48x16xbf16, #tpu.memory_space<vmem>>, vector<1x48x16xbf16>
    %66 = vector.shape_cast %65 : vector<1x48x16xbf16> to vector<48x16xbf16>
    %cst_34 = arith.constant dense<0.000000e+00> : vector<64x16xf32>
    %67 = tpu.matmul %64, %66, %cst_34 {dimension_numbers = #tpu.dot_dimension_numbers<[1], [0], [0], [1], [0, 0, 1, 1], [], []>} : vector<64x48xbf16>, vector<48x16xbf16>, vector<64x16xf32> -> vector<64x16xf32>
    %68 = arith.addf %63, %67 : vector<64x16xf32>
    %c0_35 = arith.constant 0 : index
    %c0_36 = arith.constant 0 : index
    %69 = vector.load %arg6[%c0_35, %c0_36] : memref<1x16xf32, #tpu.memory_space<vmem>>, vector<1x16xf32>
    %70 = vector.broadcast %69 : vector<1x16xf32> to vector<64x16xf32>
    %71 = arith.mulf %68, %70 : vector<64x16xf32>
    %c0_37 = arith.constant 0 : index
    %c0_38 = arith.constant 0 : index
    %72 = vector.load %arg7[%c0_37, %c0_38] : memref<1x16xf32, #tpu.memory_space<vmem>>, vector<1x16xf32>
    %73 = vector.broadcast %72 : vector<1x16xf32> to vector<64x16xf32>
    %74 = arith.addf %71, %73 : vector<64x16xf32>
    %cst_39 = arith.constant 0.000000e+00 : f32
    %75 = vector.broadcast %cst_39 : f32 to vector<64x16xf32>
    %76 = arith.cmpf oge, %74, %75 : vector<64x16xf32>
    %cst_40 = arith.constant 1.000000e-03 : f32
    %77 = vector.broadcast %cst_40 : f32 to vector<64x16xf32>
    %78 = arith.mulf %77, %74 : vector<64x16xf32>
    %79 = arith.select %76, %74, %78 : vector<64x16xi1>, vector<64x16xf32>
    %cst_41 = arith.constant dense<0.000000e+00> : vector<16xf32>
    %80 = vector.multi_reduction <add>, %79, %cst_41 [0] : vector<64x16xf32> to vector<16xf32>
    %81 = vector.shape_cast %80 : vector<16xf32> to vector<1x16xf32>
    %cst_42 = arith.constant 6.400000e+01 : f32
    %82 = vector.broadcast %cst_42 : f32 to vector<1x16xf32>
    %83 = arith.divf %81, %82 : vector<1x16xf32>
    %c0_43 = arith.constant 0 : index
    %c0_44 = arith.constant 0 : index
    %84 = vector.load %arg17[%c0_43, %c0_44] : memref<64x16xf32, #tpu.memory_space<vmem>>, vector<64x16xf32>
    tpu.vector_store %arg17[%c0_43, %c0_44], %79 {strides = array<i32>} : memref<64x16xf32, #tpu.memory_space<vmem>>, vector<64x16xf32>,
    %c0_45 = arith.constant 0 : index
    %c0_46 = arith.constant 0 : index
    %85 = vector.load %arg8[%c0_45, %c0_46] : memref<16x64xf32, #tpu.memory_space<vmem>>, vector<16x64xf32>
    %cst_47 = arith.constant dense<0.000000e+00> : vector<1x64xf32>
    %86 = tpu.matmul %83, %85, %cst_47 {dimension_numbers = #tpu.dot_dimension_numbers<[1], [0], [0], [1], [0, 0, 1, 1], [], []>} : vector<1x16xf32>, vector<16x64xf32>, vector<1x64xf32> -> vector<1x64xf32>
    %c0_48 = arith.constant 0 : index
    %c0_49 = arith.constant 0 : index
    %87 = vector.load %arg9[%c0_48, %c0_49] : memref<1x64xf32, #tpu.memory_space<vmem>>, vector<1x64xf32>
    %88 = arith.addf %86, %87 : vector<1x64xf32>
    %cst_50 = arith.constant 0.000000e+00 : f32
    %89 = vector.broadcast %cst_50 : f32 to vector<1x64xf32>
    %90 = arith.maximumf %88, %89 : vector<1x64xf32>
    %c0_51 = arith.constant 0 : index
    %c0_52 = arith.constant 0 : index
    %91 = vector.load %arg10[%c0_51, %c0_52] : memref<64x16xf32, #tpu.memory_space<vmem>>, vector<64x16xf32>
    %cst_53 = arith.constant dense<0.000000e+00> : vector<1x16xf32>
    %92 = tpu.matmul %90, %91, %cst_53 {dimension_numbers = #tpu.dot_dimension_numbers<[1], [0], [0], [1], [0, 0, 1, 1], [], []>} : vector<1x64xf32>, vector<64x16xf32>, vector<1x16xf32> -> vector<1x16xf32>
    %c0_54 = arith.constant 0 : index
    %c0_55 = arith.constant 0 : index
    %93 = vector.load %arg11[%c0_54, %c0_55] : memref<1x16xf32, #tpu.memory_space<vmem>>, vector<1x16xf32>
    %94 = arith.addf %92, %93 : vector<1x16xf32>
    %cst_56 = arith.constant 0.000000e+00 : f32
    %95 = vector.broadcast %cst_56 : f32 to vector<1x16xf32>
    %96 = arith.subf %95, %94 : vector<1x16xf32>
    %97 = math.exp %96 : vector<1x16xf32>
    %cst_57 = arith.constant 1.000000e+00 : f32
    %98 = vector.broadcast %cst_57 : f32 to vector<1x16xf32>
    %99 = arith.addf %98, %97 : vector<1x16xf32>
    %cst_58 = arith.constant 1.000000e+00 : f32
    %100 = vector.broadcast %cst_58 : f32 to vector<1x16xf32>
    %101 = arith.divf %100, %99 : vector<1x16xf32>
    %c0_59 = arith.constant 0 : index
    %c0_60 = arith.constant 0 : index
    %102 = vector.load %arg17[%c0_59, %c0_60] : memref<64x16xf32, #tpu.memory_space<vmem>>, vector<64x16xf32>
    %103 = vector.broadcast %101 : vector<1x16xf32> to vector<64x16xf32>
    %104 = arith.mulf %102, %103 : vector<64x16xf32>
    %105 = arith.truncf %104 : vector<64x16xf32> to vector<64x16xbf16>
    %c0_61 = arith.constant 0 : index
    %c0_62 = arith.constant 0 : index
    %106 = vector.load %arg12[%c0_61, %c0_62] : memref<16x64xbf16, #tpu.memory_space<vmem>>, vector<16x64xbf16>
    %cst_63 = arith.constant dense<0.000000e+00> : vector<64x64xf32>
    %107 = tpu.matmul %105, %106, %cst_63 {dimension_numbers = #tpu.dot_dimension_numbers<[1], [0], [0], [1], [0, 0, 1, 1], [], []>} : vector<64x16xbf16>, vector<16x64xbf16>, vector<64x64xf32> -> vector<64x64xf32>
    %c0_64 = arith.constant 0 : index
    %c0_65 = arith.constant 0 : index
    %108 = vector.load %arg13[%c0_64, %c0_65] : memref<1x64xf32, #tpu.memory_space<vmem>>, vector<1x64xf32>
    %109 = vector.broadcast %108 : vector<1x64xf32> to vector<64x64xf32>
    %110 = arith.mulf %107, %109 : vector<64x64xf32>
    %c0_66 = arith.constant 0 : index
    %c0_67 = arith.constant 0 : index
    %111 = vector.load %arg14[%c0_66, %c0_67] : memref<1x64xf32, #tpu.memory_space<vmem>>, vector<1x64xf32>
    %112 = vector.broadcast %111 : vector<1x64xf32> to vector<64x64xf32>
    %113 = arith.addf %110, %112 : vector<64x64xf32>
    %114 = arith.addf %113, %1 : vector<64x64xf32>
    %cst_68 = arith.constant 0.000000e+00 : f32
    %115 = vector.broadcast %cst_68 : f32 to vector<64x64xf32>
    %116 = arith.maximumf %114, %115 : vector<64x64xf32>
    %c0_69 = arith.constant 0 : index
    %c0_70 = arith.constant 0 : index
    %c0_71 = arith.constant 0 : index
    %117 = vector.load %arg15[%c0_69, %c0_70, %c0_71] : memref<1x64x64xf32, #tpu.memory_space<vmem>>, vector<1x64x64xf32>
    %118 = vector.shape_cast %117 : vector<1x64x64xf32> to vector<64x64xf32>
    %119 = vector.shape_cast %116 : vector<64x64xf32> to vector<1x64x64xf32>
    tpu.vector_store %arg15[%c0_69, %c0_70, %c0_71], %119 {strides = array<i32>} : memref<1x64x64xf32, #tpu.memory_space<vmem>>, vector<1x64x64xf32>,
    return
  }
  func.func @transform_0(%arg0: i32) -> (i32, i32, i32) {
    %c0_i32 = arith.constant 0 : i32
    %c0_i32_0 = arith.constant 0 : i32
    %c0_i32_1 = arith.constant 0 : i32
    return %arg0, %c0_i32, %c0_i32_0 : i32, i32, i32
  }
  func.func @transform_1(%arg0: i32) -> (i32, i32) {
    %c0_i32 = arith.constant 0 : i32
    %c0_i32_0 = arith.constant 0 : i32
    %c0_i32_1 = arith.constant 0 : i32
    return %c0_i32, %c0_i32_0 : i32, i32
  }
  func.func @transform_2(%arg0: i32) -> (i32, i32) {
    %c0_i32 = arith.constant 0 : i32
    %c0_i32_0 = arith.constant 0 : i32
    %c0_i32_1 = arith.constant 0 : i32
    return %c0_i32, %c0_i32_0 : i32, i32
  }
  func.func @transform_3(%arg0: i32) -> (i32, i32) {
    %c0_i32 = arith.constant 0 : i32
    %c0_i32_0 = arith.constant 0 : i32
    %c0_i32_1 = arith.constant 0 : i32
    return %c0_i32, %c0_i32_0 : i32, i32
  }
  func.func @transform_4(%arg0: i32) -> (i32, i32, i32) {
    %c0_i32 = arith.constant 0 : i32
    %c0_i32_0 = arith.constant 0 : i32
    %c0_i32_1 = arith.constant 0 : i32
    %c0_i32_2 = arith.constant 0 : i32
    return %c0_i32, %c0_i32_0, %c0_i32_1 : i32, i32, i32
  }
  func.func @transform_5(%arg0: i32) -> (i32, i32) {
    %c0_i32 = arith.constant 0 : i32
    %c0_i32_0 = arith.constant 0 : i32
    %c0_i32_1 = arith.constant 0 : i32
    return %c0_i32, %c0_i32_0 : i32, i32
  }
  func.func @transform_6(%arg0: i32) -> (i32, i32) {
    %c0_i32 = arith.constant 0 : i32
    %c0_i32_0 = arith.constant 0 : i32
    %c0_i32_1 = arith.constant 0 : i32
    return %c0_i32, %c0_i32_0 : i32, i32
  }
  func.func @transform_7(%arg0: i32) -> (i32, i32) {
    %c0_i32 = arith.constant 0 : i32
    %c0_i32_0 = arith.constant 0 : i32
    %c0_i32_1 = arith.constant 0 : i32
    return %c0_i32, %c0_i32_0 : i32, i32
  }
  func.func @transform_8(%arg0: i32) -> (i32, i32) {
    %c0_i32 = arith.constant 0 : i32
    %c0_i32_0 = arith.constant 0 : i32
    %c0_i32_1 = arith.constant 0 : i32
    return %c0_i32, %c0_i32_0 : i32, i32
  }
  func.func @transform_9(%arg0: i32) -> (i32, i32) {
    %c0_i32 = arith.constant 0 : i32
    %c0_i32_0 = arith.constant 0 : i32
    %c0_i32_1 = arith.constant 0 : i32
    return %c0_i32, %c0_i32_0 : i32, i32
  }
  func.func @transform_10(%arg0: i32) -> (i32, i32) {
    %c0_i32 = arith.constant 0 : i32
    %c0_i32_0 = arith.constant 0 : i32
    %c0_i32_1 = arith.constant 0 : i32
    return %c0_i32, %c0_i32_0 : i32, i32
  }
  func.func @transform_11(%arg0: i32) -> (i32, i32) {
    %c0_i32 = arith.constant 0 : i32
    %c0_i32_0 = arith.constant 0 : i32
    %c0_i32_1 = arith.constant 0 : i32
    return %c0_i32, %c0_i32_0 : i32, i32
  }
  func.func @transform_12(%arg0: i32) -> (i32, i32) {
    %c0_i32 = arith.constant 0 : i32
    %c0_i32_0 = arith.constant 0 : i32
    %c0_i32_1 = arith.constant 0 : i32
    return %c0_i32, %c0_i32_0 : i32, i32
  }
  func.func @transform_13(%arg0: i32) -> (i32, i32) {
    %c0_i32 = arith.constant 0 : i32
    %c0_i32_0 = arith.constant 0 : i32
    %c0_i32_1 = arith.constant 0 : i32
    return %c0_i32, %c0_i32_0 : i32, i32
  }
  func.func @transform_14(%arg0: i32) -> (i32, i32, i32) {
    %c0_i32 = arith.constant 0 : i32
    %c0_i32_0 = arith.constant 0 : i32
    %c0_i32_1 = arith.constant 0 : i32
    return %arg0, %c0_i32, %c0_i32_0 : i32, i32, i32
  }
}

</mosaic_0001>

<llo_original>
// kernel: tpu_custom_call.1
$region0: #{tpu_custom_call.1}
  #allocation0 [shape = 'u32[]', space=smem, size = 0x4, offset = 0x4, fixed_abs, tag = 'smem constant byte address 0x4 - core index']
  #allocation1 [shape = 'u32[144,128]{1,0:T(1,128)}', space=vmem, size = 0x12000, scoped, tag = 'internal scratch']
  #allocation2 [shape = 'bf16[80,48]{1,0:T(16,128)(2,1)}', space=vmem, size = 0x5000, scoped, tag = 'scratch operand']
  #allocation3 [shape = 'f32[64,16]{1,0:T(8,128)}', space=vmem, size = 0x8000, scoped, tag = 'scratch operand']
  %s0 = inlined_call_operand.vmem [shape: f32[2,64,64], index: 0, kind: input, shape index: {}]
  %s1 = inlined_call_operand.vmem [shape: bf16[64,16], index: 1, kind: input, shape index: {}]
  %s2 = inlined_call_operand.vmem [shape: f32[1,16], index: 2, kind: input, shape index: {}]
  %s3 = inlined_call_operand.vmem [shape: f32[1,16], index: 3, kind: input, shape index: {}]
  %s4 = inlined_call_operand.vmem [shape: bf16[3,48,16], index: 4, kind: input, shape index: {}]
  %s5 = inlined_call_operand.vmem [shape: f32[1,16], index: 5, kind: input, shape index: {}]
  %s6 = inlined_call_operand.vmem [shape: f32[1,16], index: 6, kind: input, shape index: {}]
  %s7 = inlined_call_operand.vmem [shape: f32[16,64], index: 7, kind: input, shape index: {}]
  %s8 = inlined_call_operand.vmem [shape: f32[1,64], index: 8, kind: input, shape index: {}]
  %s9 = inlined_call_operand.vmem [shape: f32[64,16], index: 9, kind: input, shape index: {}]
  %s10 = inlined_call_operand.vmem [shape: f32[1,16], index: 10, kind: input, shape index: {}]
  %s11 = inlined_call_operand.vmem [shape: bf16[16,64], index: 11, kind: input, shape index: {}]
  %s12 = inlined_call_operand.vmem [shape: f32[1,64], index: 12, kind: input, shape index: {}]
  %s13 = inlined_call_operand.vmem [shape: f32[1,64], index: 13, kind: input, shape index: {}]
  %s14 = inlined_call_operand.hbm [shape: f32[2,64,64], index: 14, kind: output, shape index: {}]
  %s15 = sld [smem:[#allocation0]]
  $region89: #{tpu_custom_call.1} parent=0
    _
  %s17 = ssub.s32 1, %s15
  %s18 = scalar_select 0, %s17, %s15
  $region1: #{tpu_custom_call.1} parent=0
    #allocation4 [shape = 'u8[65536]{0}', space=vmem, size = 0x10000, scoped, tag = 'output window, operand 0']
    #allocation5 [shape = 's32[2]{0}', space=sflag, size = 0x8, scoped, tag = 'scoped memory for tpu_custom_call.1']
    %19 = vsyncpa [#allocation5], 0
    %s20 = scalar_lea.sflag [#allocation5], 1
    %21 = vsyncpa %s20, 0
    loop: start=0, step=1, limit=4
    $region2: #{tpu_custom_call.1} parent=1 // loop_pre_header
      _
    $region3: #{tpu_custom_call.1} parent=1 // loop_header
      %s23 = sphi 0, %s27
      %p24 = scmp.ge.s32.totalorder %s23, 4
      %s33 = sphi 0, %s35
      %s36 = sphi 0, %s33
      %s37 = sphi 0, %s36
      %s53 = sphi 0, %s37
      %s57 = sphi 0, %s57
      %s59 = sphi 0, %s57
      %s60 = sphi 0, %s59
      %s74 = sphi 0, %s60
      %s78 = sphi 0, %s78
      %s80 = sphi 0, %s78
      %s81 = sphi 0, %s80
      %s95 = sphi 0, %s81
      %s99 = sphi 0, %s99
      %s101 = sphi 0, %s99
      %s102 = sphi 0, %s101
      %s116 = sphi 0, %s102
      %s120 = sphi 0, %s120
      %s122 = sphi 0, %s120
      %s123 = sphi 0, %s122
      %s137 = sphi 0, %s123
      %s141 = sphi 0, %s141
      %s143 = sphi 0, %s141
      %s144 = sphi 0, %s143
      %s158 = sphi 0, %s144
      %s162 = sphi 0, %s162
      %s164 = sphi 0, %s162
      %s165 = sphi 0, %s164
      %s179 = sphi 0, %s165
      %s183 = sphi 0, %s183
      %s185 = sphi 0, %s183
      %s186 = sphi 0, %s185
      %s200 = sphi 0, %s186
      %s204 = sphi 0, %s204
      %s206 = sphi 0, %s204
      %s207 = sphi 0, %s206
      %s221 = sphi 0, %s207
      %s225 = sphi 0, %s225
      %s227 = sphi 0, %s225
      %s228 = sphi 0, %s227
      %s242 = sphi 0, %s228
      %s246 = sphi 0, %s246
      %s248 = sphi 0, %s246
      %s249 = sphi 0, %s248
      %s263 = sphi 0, %s249
      %s267 = sphi 0, %s267
      %s269 = sphi 0, %s267
      %s270 = sphi 0, %s269
      %s284 = sphi 0, %s270
      %s288 = sphi 0, %s288
      %s290 = sphi 0, %s288
      %s291 = sphi 0, %s290
      %s305 = sphi 0, %s291
      %s309 = sphi 0, %s309
      %s311 = sphi 0, %s309
      %s312 = sphi 0, %s311
      %s326 = sphi 0, %s312
      %s332 = sphi 0, %s334
      %s335 = sphi 0, %s332
      %s336 = sphi 0, %s335
      %s352 = sphi 0, %s336
    $region4: #{tpu_custom_call.1} parent=1 // loop_header_branch
      %26 = sbr.rel (%p24) target = $region8
    $region5: #{tpu_custom_call.1} parent=1 // loop_body
      %s28 = ssub.s32 %s23, 1
      %s29 = ssub.s32 %s23, 2
      %s30 = sadd.s32 %s23, 1
      %s31 = ssub.s32 %s23, %s30
      %p32 = scmp.eq.s32.totalorder %s31, 0
      %s34 = sadd.s32 %s33, 1
      %s35 = scalar_select %p32, %s33, %s34
      %p38 = pneg %p32
      %p39 = scmp.eq.s32.totalorder %s23, 1
      %p40 = por %p38, %p39
      %p41 = scmp.ne.s32.totalorder %s33, %s36
      %p42 = scmp.eq.s32.totalorder %s23, 0
      %p43 = por %p41, %p42
      %p44 = scmp.ne.s32.totalorder %s33, %s36
      %p45 = scmp.eq.s32.totalorder %s28, 1
      %p46 = por %p44, %p45
      %p47 = scmp.ne.s32.totalorder %s36, %s37
      %p48 = scmp.eq.s32.totalorder %s28, 0
      %p49 = por %p47, %p48
      %p50 = scmp.ne.s32.totalorder %s36, %s37
      %p51 = scmp.eq.s32.totalorder %s29, 1
      %p52 = por %p50, %p51
      %p54 = scmp.ne.s32.totalorder %s37, %s53
      %p55 = scmp.eq.s32.totalorder %s29, 0
      %p56 = por %p54, %p55
      %s58 = sadd.s32 %s57, 1
      %p61 = scmp.eq.s32.totalorder %s23, 1
      %p62 = scmp.ne.s32.totalorder %s57, %s59
      %p63 = scmp.eq.s32.totalorder %s23, 0
      %p64 = por %p62, %p63
      %p65 = scmp.ne.s32.totalorder %s57, %s59
      %p66 = scmp.eq.s32.totalorder %s28, 1
      %p67 = por %p65, %p66
      %p68 = scmp.ne.s32.totalorder %s59, %s60
      %p69 = scmp.eq.s32.totalorder %s28, 0
      %p70 = por %p68, %p69
      %p71 = scmp.ne.s32.totalorder %s59, %s60
      %p72 = scmp.eq.s32.totalorder %s29, 1
      %p73 = por %p71, %p72
      %p75 = scmp.ne.s32.totalorder %s60, %s74
      %p76 = scmp.eq.s32.totalorder %s29, 0
      %p77 = por %p75, %p76
      %s79 = sadd.s32 %s78, 1
      %p82 = scmp.eq.s32.totalorder %s23, 1
      %p83 = scmp.ne.s32.totalorder %s78, %s80
      %p84 = scmp.eq.s32.totalorder %s23, 0
      %p85 = por %p83, %p84
      %p86 = scmp.ne.s32.totalorder %s78, %s80
      %p87 = scmp.eq.s32.totalorder %s28, 1
      %p88 = por %p86, %p87
      %p89 = scmp.ne.s32.totalorder %s80, %s81
      %p90 = scmp.eq.s32.totalorder %s28, 0
      %p91 = por %p89, %p90
      %p92 = scmp.ne.s32.totalorder %s80, %s81
      %p93 = scmp.eq.s32.totalorder %s29, 1
      %p94 = por %p92, %p93
      %p96 = scmp.ne.s32.totalorder %s81, %s95
      %p97 = scmp.eq.s32.totalorder %s29, 0
      %p98 = por %p96, %p97
      %s100 = sadd.s32 %s99, 1
      %p103 = scmp.eq.s32.totalorder %s23, 1
      %p104 = scmp.ne.s32.totalorder %s99, %s101
      %p105 = scmp.eq.s32.totalorder %s23, 0
      %p106 = por %p104, %p105
      %p107 = scmp.ne.s32.totalorder %s99, %s101
      %p108 = scmp.eq.s32.totalorder %s28, 1
      %p109 = por %p107, %p108
      %p110 = scmp.ne.s32.totalorder %s101, %s102
      %p111 = scmp.eq.s32.totalorder %s28, 0
      %p112 = por %p110, %p111
      %p113 = scmp.ne.s32.totalorder %s101, %s102
      %p114 = scmp.eq.s32.totalorder %s29, 1
      %p115 = por %p113, %p114
      %p117 = scmp.ne.s32.totalorder %s102, %s116
      %p118 = scmp.eq.s32.totalorder %s29, 0
      %p119 = por %p117, %p118
      %s121 = sadd.s32 %s120, 1
      %p124 = scmp.eq.s32.totalorder %s23, 1
      %p125 = scmp.ne.s32.totalorder %s120, %s122
      %p126 = scmp.eq.s32.totalorder %s23, 0
      %p127 = por %p125, %p126
      %p128 = scmp.ne.s32.totalorder %s120, %s122
      %p129 = scmp.eq.s32.totalorder %s28, 1
      %p130 = por %p128, %p129
      %p131 = scmp.ne.s32.totalorder %s122, %s123
      %p132 = scmp.eq.s32.totalorder %s28, 0
      %p133 = por %p131, %p132
      %p134 = scmp.ne.s32.totalorder %s122, %s123
      %p135 = scmp.eq.s32.totalorder %s29, 1
      %p136 = por %p134, %p135
      %p138 = scmp.ne.s32.totalorder %s123, %s137
      %p139 = scmp.eq.s32.totalorder %s29, 0
      %p140 = por %p138, %p139
      %s142 = sadd.s32 %s141, 1
      %p145 = scmp.eq.s32.totalorder %s23, 1
      %p146 = scmp.ne.s32.totalorder %s141, %s143
      %p147 = scmp.eq.s32.totalorder %s23, 0
      %p148 = por %p146, %p147
      %p149 = scmp.ne.s32.totalorder %s141, %s143
      %p150 = scmp.eq.s32.totalorder %s28, 1
      %p151 = por %p149, %p150
      %p152 = scmp.ne.s32.totalorder %s143, %s144
      %p153 = scmp.eq.s32.totalorder %s28, 0
      %p154 = por %p152, %p153
      %p155 = scmp.ne.s32.totalorder %s143, %s144
      %p156 = scmp.eq.s32.totalorder %s29, 1
      %p157 = por %p155, %p156
      %p159 = scmp.ne.s32.totalorder %s144, %s158
      %p160 = scmp.eq.s32.totalorder %s29, 0
      %p161 = por %p159, %p160
      %s163 = sadd.s32 %s162, 1
      %p166 = scmp.eq.s32.totalorder %s23, 1
      %p167 = scmp.ne.s32.totalorder %s162, %s164
      %p168 = scmp.eq.s32.totalorder %s23, 0
      %p169 = por %p167, %p168
      %p170 = scmp.ne.s32.totalorder %s162, %s164
      %p171 = scmp.eq.s32.totalorder %s28, 1
      %p172 = por %p170, %p171
      %p173 = scmp.ne.s32.totalorder %s164, %s165
      %p174 = scmp.eq.s32.totalorder %s28, 0
      %p175 = por %p173, %p174
      %p176 = scmp.ne.s32.totalorder %s164, %s165
      %p177 = scmp.eq.s32.totalorder %s29, 1
      %p178 = por %p176, %p177
      %p180 = scmp.ne.s32.totalorder %s165, %s179
      %p181 = scmp.eq.s32.totalorder %s29, 0
      %p182 = por %p180, %p181
      %s184 = sadd.s32 %s183, 1
      %p187 = scmp.eq.s32.totalorder %s23, 1
      %p188 = scmp.ne.s32.totalorder %s183, %s185
      %p189 = scmp.eq.s32.totalorder %s23, 0
      %p190 = por %p188, %p189
      %p191 = scmp.ne.s32.totalorder %s183, %s185
      %p192 = scmp.eq.s32.totalorder %s28, 1
      %p193 = por %p191, %p192
      %p194 = scmp.ne.s32.totalorder %s185, %s186
      %p195 = scmp.eq.s32.totalorder %s28, 0
      %p196 = por %p194, %p195
      %p197 = scmp.ne.s32.totalorder %s185, %s186
      %p198 = scmp.eq.s32.totalorder %s29, 1
      %p199 = por %p197, %p198
      %p201 = scmp.ne.s32.totalorder %s186, %s200
      %p202 = scmp.eq.s32.totalorder %s29, 0
      %p203 = por %p201, %p202
      %s205 = sadd.s32 %s204, 1
      %p208 = scmp.eq.s32.totalorder %s23, 1
      %p209 = scmp.ne.s32.totalorder %s204, %s206
      %p210 = scmp.eq.s32.totalorder %s23, 0
      %p211 = por %p209, %p210
      %p212 = scmp.ne.s32.totalorder %s204, %s206
      %p213 = scmp.eq.s32.totalorder %s28, 1
      %p214 = por %p212, %p213
      %p215 = scmp.ne.s32.totalorder %s206, %s207
      %p216 = scmp.eq.s32.totalorder %s28, 0
      %p217 = por %p215, %p216
      %p218 = scmp.ne.s32.totalorder %s206, %s207
      %p219 = scmp.eq.s32.totalorder %s29, 1
      %p220 = por %p218, %p219
      %p222 = scmp.ne.s32.totalorder %s207, %s221
      %p223 = scmp.eq.s32.totalorder %s29, 0
      %p224 = por %p222, %p223
      %s226 = sadd.s32 %s225, 1
      %p229 = scmp.eq.s32.totalorder %s23, 1
      %p230 = scmp.ne.s32.totalorder %s225, %s227
      %p231 = scmp.eq.s32.totalorder %s23, 0
      %p232 = por %p230, %p231
      %p233 = scmp.ne.s32.totalorder %s225, %s227
      %p234 = scmp.eq.s32.totalorder %s28, 1
      %p235 = por %p233, %p234
      %p236 = scmp.ne.s32.totalorder %s227, %s228
      %p237 = scmp.eq.s32.totalorder %s28, 0
      %p238 = por %p236, %p237
      %p239 = scmp.ne.s32.totalorder %s227, %s228
      %p240 = scmp.eq.s32.totalorder %s29, 1
      %p241 = por %p239, %p240
      %p243 = scmp.ne.s32.totalorder %s228, %s242
      %p244 = scmp.eq.s32.totalorder %s29, 0
      %p245 = por %p243, %p244
      %s247 = sadd.s32 %s246, 1
      %p250 = scmp.eq.s32.totalorder %s23, 1
      %p251 = scmp.ne.s32.totalorder %s246, %s248
      %p252 = scmp.eq.s32.totalorder %s23, 0
      %p253 = por %p251, %p252
      %p254 = scmp.ne.s32.totalorder %s246, %s248
      %p255 = scmp.eq.s32.totalorder %s28, 1
      %p256 = por %p254, %p255
      %p257 = scmp.ne.s32.totalorder %s248, %s249
      %p258 = scmp.eq.s32.totalorder %s28, 0
      %p259 = por %p257, %p258
      %p260 = scmp.ne.s32.totalorder %s248, %s249
      %p261 = scmp.eq.s32.totalorder %s29, 1
      %p262 = por %p260, %p261
      %p264 = scmp.ne.s32.totalorder %s249, %s263
      %p265 = scmp.eq.s32.totalorder %s29, 0
      %p266 = por %p264, %p265
      %s268 = sadd.s32 %s267, 1
      %p271 = scmp.eq.s32.totalorder %s23, 1
      %p272 = scmp.ne.s32.totalorder %s267, %s269
      %p273 = scmp.eq.s32.totalorder %s23, 0
      %p274 = por %p272, %p273
      %p275 = scmp.ne.s32.totalorder %s267, %s269
      %p276 = scmp.eq.s32.totalorder %s28, 1
      %p277 = por %p275, %p276
      %p278 = scmp.ne.s32.totalorder %s269, %s270
      %p279 = scmp.eq.s32.totalorder %s28, 0
      %p280 = por %p278, %p279
      %p281 = scmp.ne.s32.totalorder %s269, %s270
      %p282 = scmp.eq.s32.totalorder %s29, 1
      %p283 = por %p281, %p282
      %p285 = scmp.ne.s32.totalorder %s270, %s284
      %p286 = scmp.eq.s32.totalorder %s29, 0
      %p287 = por %p285, %p286
      %s289 = sadd.s32 %s288, 1
      %p292 = scmp.eq.s32.totalorder %s23, 1
      %p293 = scmp.ne.s32.totalorder %s288, %s290
      %p294 = scmp.eq.s32.totalorder %s23, 0
      %p295 = por %p293, %p294
      %p296 = scmp.ne.s32.totalorder %s288, %s290
      %p297 = scmp.eq.s32.totalorder %s28, 1
      %p298 = por %p296, %p297
      %p299 = scmp.ne.s32.totalorder %s290, %s291
      %p300 = scmp.eq.s32.totalorder %s28, 0
      %p301 = por %p299, %p300
      %p302 = scmp.ne.s32.totalorder %s290, %s291
      %p303 = scmp.eq.s32.totalorder %s29, 1
      %p304 = por %p302, %p303
      %p306 = scmp.ne.s32.totalorder %s291, %s305
      %p307 = scmp.eq.s32.totalorder %s29, 0
      %p308 = por %p306, %p307
      %s310 = sadd.s32 %s309, 1
      %p313 = scmp.eq.s32.totalorder %s23, 1
      %p314 = scmp.ne.s32.totalorder %s309, %s311
      %p315 = scmp.eq.s32.totalorder %s23, 0
      %p316 = por %p314, %p315
      %p317 = scmp.ne.s32.totalorder %s309, %s311
      %p318 = scmp.eq.s32.totalorder %s28, 1
      %p319 = por %p317, %p318
      %p320 = scmp.ne.s32.totalorder %s311, %s312
      %p321 = scmp.eq.s32.totalorder %s28, 0
      %p322 = por %p320, %p321
      %p323 = scmp.ne.s32.totalorder %s311, %s312
      %p324 = scmp.eq.s32.totalorder %s29, 1
      %p325 = por %p323, %p324
      %p327 = scmp.ne.s32.totalorder %s312, %s326
      %p328 = scmp.eq.s32.totalorder %s29, 0
      %p329 = por %p327, %p328
      %s330 = ssub.s32 %s23, %s30
      %p331 = scmp.eq.s32.totalorder %s330, 0
      %s333 = sadd.s32 %s332, 1
      %s334 = scalar_select %p331, %s332, %s333
      %p337 = pneg %p331
      %p338 = scmp.eq.s32.totalorder %s23, 1
      %p339 = por %p337, %p338
      %p340 = scmp.ne.s32.totalorder %s332, %s335
      %p341 = scmp.eq.s32.totalorder %s23, 0
      %p342 = por %p340, %p341
      %p343 = scmp.ne.s32.totalorder %s332, %s335
      %p344 = scmp.eq.s32.totalorder %s28, 1
      %p345 = por %p343, %p344
      %p346 = scmp.ne.s32.totalorder %s335, %s336
      %p347 = scmp.eq.s32.totalorder %s28, 0
      %p348 = por %p346, %p347
      %p349 = scmp.ne.s32.totalorder %s335, %s336
      %p350 = scmp.eq.s32.totalorder %s29, 1
      %p351 = por %p349, %p350
      %p353 = scmp.ne.s32.totalorder %s336, %s352
      %p354 = scmp.eq.s32.totalorder %s29, 0
      %p355 = por %p353, %p354
      %p356 = scmp.le.s32.totalorder 1, %s23
      %p357 = scmp.lt.s32.totalorder %s23, 3
      %p358 = pnand %p356, %p357
      %p359 = pneg %p358
      // Predicated region
      $region9: #{tpu_custom_call.1} parent=5 // pred_check
        _
      $region10: #{tpu_custom_call.1} parent=5 // pred_check_branch
        %361 = sbr.rel (%p358) target = $region12
      $region11: #{tpu_custom_call.1} parent=5 // pred_region
        %s362 = ssub.s32 %s23, 1
        // Predicated region
        $region13: #{tpu_custom_call.1} parent=11 // pred_check
          %p363 = pneg %p70
        $region14: #{tpu_custom_call.1} parent=11 // pred_check_branch
          %365 = sbr.rel (%p363) target = $region16
        $region15: #{tpu_custom_call.1} parent=11 // pred_region
          _
        $region16: #{tpu_custom_call.1} parent=11 // pred_fallthru
          _
        // Predicated region
        $region17: #{tpu_custom_call.1} parent=11 // pred_check
          %p366 = pneg %p91
        $region18: #{tpu_custom_call.1} parent=11 // pred_check_branch
          %368 = sbr.rel (%p366) target = $region20
        $region19: #{tpu_custom_call.1} parent=11 // pred_region
          _
        $region20: #{tpu_custom_call.1} parent=11 // pred_fallthru
          _
        // Predicated region
        $region21: #{tpu_custom_call.1} parent=11 // pred_check
          %p369 = pneg %p112
        $region22: #{tpu_custom_call.1} parent=11 // pred_check_branch
          %371 = sbr.rel (%p369) target = $region24
        $region23: #{tpu_custom_call.1} parent=11 // pred_region
          _
        $region24: #{tpu_custom_call.1} parent=11 // pred_fallthru
          _
        // Predicated region
        $region25: #{tpu_custom_call.1} parent=11 // pred_check
          %p372 = pneg %p133
        $region26: #{tpu_custom_call.1} parent=11 // pred_check_branch
          %374 = sbr.rel (%p372) target = $region28
        $region27: #{tpu_custom_call.1} parent=11 // pred_region
          _
        $region28: #{tpu_custom_call.1} parent=11 // pred_fallthru
          _
        // Predicated region
        $region29: #{tpu_custom_call.1} parent=11 // pred_check
          %p375 = pneg %p154
        $region30: #{tpu_custom_call.1} parent=11 // pred_check_branch
          %377 = sbr.rel (%p375) target = $region32
        $region31: #{tpu_custom_call.1} parent=11 // pred_region
          _
        $region32: #{tpu_custom_call.1} parent=11 // pred_fallthru
          _
        // Predicated region
        $region33: #{tpu_custom_call.1} parent=11 // pred_check
          %p378 = pneg %p175
        $region34: #{tpu_custom_call.1} parent=11 // pred_check_branch
          %380 = sbr.rel (%p378) target = $region36
        $region35: #{tpu_custom_call.1} parent=11 // pred_region
          _
        $region36: #{tpu_custom_call.1} parent=11 // pred_fallthru
          _
        // Predicated region
        $region37: #{tpu_custom_call.1} parent=11 // pred_check
          %p381 = pneg %p196
        $region38: #{tpu_custom_call.1} parent=11 // pred_check_branch
          %383 = sbr.rel (%p381) target = $region40
        $region39: #{tpu_custom_call.1} parent=11 // pred_region
          _
        $region40: #{tpu_custom_call.1} parent=11 // pred_fallthru
          _
        // Predicated region
        $region41: #{tpu_custom_call.1} parent=11 // pred_check
          %p384 = pneg %p217
        $region42: #{tpu_custom_call.1} parent=11 // pred_check_branch
          %386 = sbr.rel (%p384) target = $region44
        $region43: #{tpu_custom_call.1} parent=11 // pred_region
          _
        $region44: #{tpu_custom_call.1} parent=11 // pred_fallthru
          _
        // Predicated region
        $region45: #{tpu_custom_call.1} parent=11 // pred_check
          %p387 = pneg %p238
        $region46: #{tpu_custom_call.1} parent=11 // pred_check_branch
          %389 = sbr.rel (%p387) target = $region48
        $region47: #{tpu_custom_call.1} parent=11 // pred_region
          _
        $region48: #{tpu_custom_call.1} parent=11 // pred_fallthru
          _
        // Predicated region
        $region49: #{tpu_custom_call.1} parent=11 // pred_check
          %p390 = pneg %p259
        $region50: #{tpu_custom_call.1} parent=11 // pred_check_branch
          %392 = sbr.rel (%p390) target = $region52
        $region51: #{tpu_custom_call.1} parent=11 // pred_region
          _
        $region52: #{tpu_custom_call.1} parent=11 // pred_fallthru
          _
        // Predicated region
        $region53: #{tpu_custom_call.1} parent=11 // pred_check
          %p393 = pneg %p280
        $region54: #{tpu_custom_call.1} parent=11 // pred_check_branch
          %395 = sbr.rel (%p393) target = $region56
        $region55: #{tpu_custom_call.1} parent=11 // pred_region
          _
        $region56: #{tpu_custom_call.1} parent=11 // pred_fallthru
          _
        // Predicated region
        $region57: #{tpu_custom_call.1} parent=11 // pred_check
          %p396 = pneg %p301
        $region58: #{tpu_custom_call.1} parent=11 // pred_check_branch
          %398 = sbr.rel (%p396) target = $region60
        $region59: #{tpu_custom_call.1} parent=11 // pred_region
          _
        $region60: #{tpu_custom_call.1} parent=11 // pred_fallthru
          _
        // Predicated region
        $region61: #{tpu_custom_call.1} parent=11 // pred_check
          %p399 = pneg %p322
        $region62: #{tpu_custom_call.1} parent=11 // pred_check_branch
          %401 = sbr.rel (%p399) target = $region64
        $region63: #{tpu_custom_call.1} parent=11 // pred_region
          _
        $region64: #{tpu_custom_call.1} parent=11 // pred_fallthru
          _
      $region12: #{tpu_custom_call.1} parent=5 // pred_fallthru
        _
      %p402 = scmp.lt.s32.totalorder %s23, 2
      // Predicated region
      $region65: #{tpu_custom_call.1} parent=5 // pred_check
        %p403 = pneg %p402
      $region66: #{tpu_custom_call.1} parent=5 // pred_check_branch
        %405 = sbr.rel (%p403) target = $region68
      $region67: #{tpu_custom_call.1} parent=5 // pred_region
        // Predicated region
        $region69: #{tpu_custom_call.1} parent=67 // pred_check
          %p406 = pneg %p43
        $region70: #{tpu_custom_call.1} parent=67 // pred_check_branch
          %408 = sbr.rel (%p406) target = $region72
        $region71: #{tpu_custom_call.1} parent=67 // pred_region
          %p409 = scmp.lt.s32.totalorder %s23, 1
          %s410 = scalar_select %p409, %s23, 1
          %s411 = smul.addr %s410, 8
          %s412 = smul.addr %s411, 8
          %s413 = scalar_lea.vmem %s0, %s412
        $region72: #{tpu_custom_call.1} parent=67 // pred_fallthru
          _
      $region68: #{tpu_custom_call.1} parent=5 // pred_fallthru
        _
      %p414 = scmp.le.s32.totalorder 1, %s23
      %p415 = scmp.lt.s32.totalorder %s23, 3
      %p416 = pnand %p414, %p415
      %p417 = pneg %p416
      // Predicated region
      $region73: #{tpu_custom_call.1} parent=5 // pred_check
        _
      $region74: #{tpu_custom_call.1} parent=5 // pred_check_branch
        %419 = sbr.rel (%p416) target = $region76
      $region75: #{tpu_custom_call.1} parent=5 // pred_region
        %s420 = ssub.s32 %s23, 1
        %p421 = scmp.lt.s32.totalorder %s28, 1
        %s422 = scalar_select %p421, %s28, 1
        %s423 = smul.addr %s422, 8
        %s424 = smul.addr %s423, 8
        %s425 = scalar_lea.vmem %s0, %s424
        %p426 = pneg %p49
        %p427 = pneg %p46
        %p428 = pneg %p70
        %p429 = pneg %p67
        %p430 = pneg %p91
        %p431 = pneg %p88
        %p432 = pneg %p112
        %p433 = pneg %p109
        %p434 = pneg %p133
        %p435 = pneg %p130
        %p436 = pneg %p154
        %p437 = pneg %p151
        %p438 = pneg %p175
        %p439 = pneg %p172
        %p440 = pneg %p196
        %p441 = pneg %p193
        %p442 = pneg %p217
        %p443 = pneg %p214
        %p444 = pneg %p238
        %p445 = pneg %p235
        %p446 = pneg %p259
        %p447 = pneg %p256
        %p448 = pneg %p280
        %p449 = pneg %p277
        %p450 = pneg %p301
        %p451 = pneg %p298
        %p452 = pneg %p322
        %p453 = pneg %p319
        %p454 = pneg %p348
        %p455 = pneg %p345
        %s456 = sand.u32 %s335, 1
        %s457 = scalar_lea.sflag [#allocation5], %s456
        %s458 = sand.u32 %s335, 1
        %s459 = smul.addr %s458, 64
        %s460 = scalar_lea.vmem [#allocation4], %s459
        %p461 = scmp.lt.s32.totalorder %s28, 1
        %s462 = scalar_select %p461, %s28, 1
        %s463 = smul.addr %s462, 8
        %s464 = smul.addr %s463, 8
        %s465 = scalar_lea.vmem %s0, %s464
        %v467 = vld [vmem:[%s465] sm:$0xff]
        %v468 = vld [vmem:[%s465 + $0x8] sm:$0xff]
        %v469 = vld [vmem:[%s465 + $0x10] sm:$0xff]
        %v470 = vld [vmem:[%s465 + $0x18] sm:$0xff]
        %v471 = vld [vmem:[%s465 + $0x20] sm:$0xff]
        %v472 = vld [vmem:[%s465 + $0x28] sm:$0xff]
        %v473 = vld [vmem:[%s465 + $0x30] sm:$0xff]
        %v474 = vld [vmem:[%s465 + $0x38] sm:$0xff]
        %v475 = vpack.c.bf16 %v468, %v467
        %v476 = vpack.c.bf16 %v470, %v469
        %v477 = vpack.c.bf16 %v472, %v471
        %v478 = vpack.c.bf16 %v474, %v473
        %v479 = vld [vmem:[%s1] sm:$0xf]
        %v480 = vld [vmem:[%s1 + $0x4] sm:$0xf]
        %v481 = vld [vmem:[%s1 + $0x8] sm:$0xf]
        %v482 = vld [vmem:[%s1 + $0xc] sm:$0xf]
        %v483 = vld [vmem:[%s1 + $0x10] sm:$0xf]
        %v484 = vld [vmem:[%s1 + $0x14] sm:$0xf]
        %v485 = vld [vmem:[%s1 + $0x18] sm:$0xf]
        %v486 = vld [vmem:[%s1 + $0x1c] sm:$0xf]
        %v495 = vunpack.c.l.b16 %v479
        %v496 = vunpack.c.l.b16 %v480
        %v497 = vunpack.c.l.b16 %v481
        %v498 = vunpack.c.l.b16 %v482
        %v499 = vunpack.c.l.b16 %v483
        %v500 = vunpack.c.l.b16 %v484
        %v501 = vunpack.c.l.b16 %v485
        %v502 = vunpack.c.l.b16 %v486
        %v503 = vpack.c.b16 %v496, %v495
        %v504 = vpack.c.b16 %v498, %v497
        %v505 = vpack.c.b16 %v500, %v499
        %v506 = vpack.c.b16 %v502, %v501
        %vm511 = vcmask 523264
        %v513 = vsel %vm511, %v475, 0
        %v516 = vsel %vm511, %v476, 0
        %v519 = vsel %vm511, %v477, 0
        %v522 = vsel %vm511, %v478, 0
        %524 = vmatprep.subr.bf16.mxu0 0
        %525 = vmatpush1.bf16.msra.mxu0 %v503
        %526 = vmatprep.subr.bf16.mxu0 0
        %527 = vmatpush1.bf16.msra.mxu0 %v504
        %528 = vmatprep.subr.bf16.mxu0 0
        %529 = vmatpush1.bf16.msra.mxu0 %v505
        %530 = vmatprep.subr.bf16.mxu0 0
        %531 = vmatpush1.bf16.msra.mxu0 %v506
        %532 = vmatprep.subr.bf16.mxu0 0
        %533 = vmatpush1.bf16.msra.mxu0 0
        %534 = vmatprep.subr.bf16.mxu0 0
        %535 = vmatpush1.bf16.msra.mxu0 0
        %536 = vmatprep.subr.bf16.mxu0 0
        %537 = vmatpush1.bf16.msra.mxu0 0
        %538 = vmatprep.subr.bf16.mxu0 0
        %539 = vmatpush1.bf16.msra.mxu0 0
        %540 = vmatprep.subr.bf16.mxu0 0
        %541 = vmatpush1.bf16.msra.mxu0 0
        %542 = vmatprep.subr.bf16.mxu0 0
        %543 = vmatpush1.bf16.msra.mxu0 0
        %544 = vmatprep.subr.bf16.mxu0 0
        %545 = vmatpush1.bf16.msra.mxu0 0
        %546 = vmatprep.subr.bf16.mxu0 0
        %547 = vmatpush1.bf16.msra.mxu0 0
        %548 = vmatprep.subr.bf16.mxu0 0
        %549 = vmatpush1.bf16.msra.mxu0 0
        %550 = vmatprep.subr.bf16.mxu0 0
        %551 = vmatpush1.bf16.msra.mxu0 0
        %552 = vmatprep.subr.bf16.mxu0 0
        %553 = vmatpush1.bf16.msra.mxu0 0
        %554 = vmatprep.subr.bf16.mxu0 0
        %555 = vmatpush1.bf16.msra.mxu0 0
        %556 = vmatprep.mubr.bf16.mxu0 0
        %557 = vmatmul.mubr.bf16.gmra.mrb[0].mxu0 %v513
        %v558 = vpop.f32.mrb[0].mxu0
        %v559 = vadd.f32 0.0, %v558
        %v560 = vpop.f32.mrb[0].mxu0
        %v561 = vpop.f32.mrb[0].mxu0
        %v562 = vadd.f32 0.0, %v561
        %v563 = vpop.f32.mrb[0].mxu0
        %564 = vmatprep.mubr.bf16.mxu0 0
        %565 = vmatmul.mubr.bf16.gmra.mrb[0].mxu0 %v516
        %v566 = vpop.f32.mrb[0].mxu0
        %v567 = vadd.f32 0.0, %v566
        %v568 = vpop.f32.mrb[0].mxu0
        %v569 = vpop.f32.mrb[0].mxu0
        %v570 = vadd.f32 0.0, %v569
        %v571 = vpop.f32.mrb[0].mxu0
        %572 = vmatprep.mubr.bf16.mxu0 0
        %573 = vmatmul.mubr.bf16.gmra.mrb[0].mxu0 %v519
        %v574 = vpop.f32.mrb[0].mxu0
        %v575 = vadd.f32 0.0, %v574
        %v576 = vpop.f32.mrb[0].mxu0
        %v577 = vpop.f32.mrb[0].mxu0
        %v578 = vadd.f32 0.0, %v577
        %v579 = vpop.f32.mrb[0].mxu0
        %580 = vmatprep.mubr.bf16.mxu0 0
        %581 = vmatmul.mubr.bf16.gmra.mrb[0].mxu0 %v522
        %v582 = vpop.f32.mrb[0].mxu0
        %v583 = vadd.f32 0.0, %v582
        %v584 = vpop.f32.mrb[0].mxu0
        %v585 = vpop.f32.mrb[0].mxu0
        %v586 = vadd.f32 0.0, %v585
        %v587 = vpop.f32.mrb[0].mxu0
        %588 = vdwg.mxu0
        %v589 = vld [vmem:[%s2] sm:$0x1]
        %v591 = vlaneseq
        %v592 = vshrl.u32 %v591, 7
        %v593 = vsub.s32 0, %v592
        %v594 = vrot.slane %v589, %v593
        %v596 = vmul.f32 %v559, %v594
        %v597 = vmul.f32 %v562, %v594
        %v598 = vmul.f32 %v567, %v594
        %v599 = vmul.f32 %v570, %v594
        %v600 = vmul.f32 %v575, %v594
        %v601 = vmul.f32 %v578, %v594
        %v602 = vmul.f32 %v583, %v594
        %v603 = vmul.f32 %v586, %v594
        %v604 = vld [vmem:[%s3] sm:$0x1]
        %v606 = vlaneseq
        %v607 = vshrl.u32 %v606, 7
        %v608 = vsub.s32 0, %v607
        %v609 = vrot.slane %v604, %v608
        %v611 = vadd.f32 %v596, %v609
        %v612 = vadd.f32 %v597, %v609
        %v613 = vadd.f32 %v598, %v609
        %v614 = vadd.f32 %v599, %v609
        %v615 = vadd.f32 %v600, %v609
        %v616 = vadd.f32 %v601, %v609
        %v617 = vadd.f32 %v602, %v609
        %v618 = vadd.f32 %v603, %v609
        %vm619 = vcmp.ge.f32.partialorder %v611, 0.0
        %vm620 = vcmp.ge.f32.partialorder %v612, 0.0
        %vm621 = vcmp.ge.f32.partialorder %v613, 0.0
        %vm622 = vcmp.ge.f32.partialorder %v614, 0.0
        %vm623 = vcmp.ge.f32.partialorder %v615, 0.0
        %vm624 = vcmp.ge.f32.partialorder %v616, 0.0
        %vm625 = vcmp.ge.f32.partialorder %v617, 0.0
        %vm626 = vcmp.ge.f32.partialorder %v618, 0.0
        %v627 = vmul.f32 %v611, 0.001
        %v628 = vmul.f32 %v612, 0.001
        %v629 = vmul.f32 %v613, 0.001
        %v630 = vmul.f32 %v614, 0.001
        %v631 = vmul.f32 %v615, 0.001
        %v632 = vmul.f32 %v616, 0.001
        %v633 = vmul.f32 %v617, 0.001
        %v634 = vmul.f32 %v618, 0.001
        %v635 = vsel %vm619, %v611, %v627
        %v636 = vsel %vm620, %v612, %v628
        %v637 = vsel %vm621, %v613, %v629
        %v638 = vsel %vm622, %v614, %v630
        %v639 = vsel %vm623, %v615, %v631
        %v640 = vsel %vm624, %v616, %v632
        %v641 = vsel %vm625, %v617, %v633
        %v642 = vsel %vm626, %v618, %v634
        %v643 = vlaneseq
        %v644 = vshrl.u32 %v643, 7
        %v645 = vadd.s32 %v644, 8
        %v646 = vadd.s32 %v644, 16
        %v647 = vadd.s32 %v644, 24
        %v648 = vadd.s32 %v644, 32
        %v649 = vadd.s32 %v644, 40
        %v650 = vadd.s32 %v644, 48
        %v651 = vadd.s32 %v644, 56
        %vm652 = vcmp.lt.s32.totalorder %v644, 0
        %v653 = vsub.s32 0, %v644
        %v654 = vsel %vm652, %v653, %v644
        %v655 = vshrl.u32 %v654, 3
        %v656 = vand.u32 %v654, 7
        %v657 = vsub.s32 0, %v656
        %v658 = vsel %vm652, %v657, %v656
        %vm659 = vcmp.lt.s32.totalorder %v645, 0
        %v660 = vsub.s32 0, %v645
        %v661 = vsel %vm659, %v660, %v645
        %v662 = vshrl.u32 %v661, 3
        %v663 = vand.u32 %v661, 7
        %v664 = vsub.s32 0, %v663
        %v665 = vsel %vm659, %v664, %v663
        %vm666 = vcmp.lt.s32.totalorder %v646, 0
        %v667 = vsub.s32 0, %v646
        %v668 = vsel %vm666, %v667, %v646
        %v669 = vshrl.u32 %v668, 3
        %v670 = vand.u32 %v668, 7
        %v671 = vsub.s32 0, %v670
        %v672 = vsel %vm666, %v671, %v670
        %vm673 = vcmp.lt.s32.totalorder %v647, 0
        %v674 = vsub.s32 0, %v647
        %v675 = vsel %vm673, %v674, %v647
        %v676 = vshrl.u32 %v675, 3
        %v677 = vand.u32 %v675, 7
        %v678 = vsub.s32 0, %v677
        %v679 = vsel %vm673, %v678, %v677
        %vm680 = vcmp.lt.s32.totalorder %v648, 0
        %v681 = vsub.s32 0, %v648
        %v682 = vsel %vm680, %v681, %v648
        %v683 = vshrl.u32 %v682, 3
        %v684 = vand.u32 %v682, 7
        %v685 = vsub.s32 0, %v684
        %v686 = vsel %vm680, %v685, %v684
        %vm687 = vcmp.lt.s32.totalorder %v649, 0
        %v688 = vsub.s32 0, %v649
        %v689 = vsel %vm687, %v688, %v649
        %v690 = vshrl.u32 %v689, 3
        %v691 = vand.u32 %v689, 7
        %v692 = vsub.s32 0, %v691
        %v693 = vsel %vm687, %v692, %v691
        %vm694 = vcmp.lt.s32.totalorder %v650, 0
        %v695 = vsub.s32 0, %v650
        %v696 = vsel %vm694, %v695, %v650
        %v697 = vshrl.u32 %v696, 3
        %v698 = vand.u32 %v696, 7
        %v699 = vsub.s32 0, %v698
        %v700 = vsel %vm694, %v699, %v698
        %vm701 = vcmp.lt.s32.totalorder %v651, 0
        %v702 = vsub.s32 0, %v651
        %v703 = vsel %vm701, %v702, %v651
        %v704 = vshrl.u32 %v703, 3
        %v705 = vand.u32 %v703, 7
        %v706 = vsub.s32 0, %v705
        %v707 = vsel %vm701, %v706, %v705
        %vm708 = vcmp.ne.s32.totalorder %v658, 0
        %vm709 = vcmp.ne.s32.totalorder %v665, 0
        %vm710 = vcmp.ne.s32.totalorder %v672, 0
        %vm711 = vcmp.ne.s32.totalorder %v679, 0
        %vm712 = vcmp.ne.s32.totalorder %v686, 0
        %vm713 = vcmp.ne.s32.totalorder %v693, 0
        %vm714 = vcmp.ne.s32.totalorder %v700, 0
        %vm715 = vcmp.ne.s32.totalorder %v707, 0
        %vm716 = vcmp.lt.s32.totalorder %v658, 0
        %vm717 = vcmp.lt.s32.totalorder %v665, 0
        %vm718 = vcmp.lt.s32.totalorder %v672, 0
        %vm719 = vcmp.lt.s32.totalorder %v679, 0
        %vm720 = vcmp.lt.s32.totalorder %v686, 0
        %vm721 = vcmp.lt.s32.totalorder %v693, 0
        %vm722 = vcmp.lt.s32.totalorder %v700, 0
        %vm723 = vcmp.lt.s32.totalorder %v707, 0
        %vm724 = vmand %vm716, %vm708
        %vm725 = vmand %vm717, %vm709
        %vm726 = vmand %vm718, %vm710
        %vm727 = vmand %vm719, %vm711
        %vm728 = vmand %vm720, %vm712
        %vm729 = vmand %vm721, %vm713
        %vm730 = vmand %vm722, %vm714
        %vm731 = vmand %vm723, %vm715
        %v732 = vadd.s32 %v658, 8
        %v733 = vadd.s32 %v665, 8
        %v734 = vadd.s32 %v672, 8
        %v735 = vadd.s32 %v679, 8
        %v736 = vadd.s32 %v686, 8
        %v737 = vadd.s32 %v693, 8
        %v738 = vadd.s32 %v700, 8
        %v739 = vadd.s32 %v707, 8
        %v740 = vsel %vm724, %v732, %v658
        %v741 = vsel %vm725, %v733, %v665
        %v742 = vsel %vm726, %v734, %v672
        %v743 = vsel %vm727, %v735, %v679
        %v744 = vsel %vm728, %v736, %v686
        %v745 = vsel %vm729, %v737, %v693
        %v746 = vsel %vm730, %v738, %v700
        %v747 = vsel %vm731, %v739, %v707
        %vm748 = vcmp.gt.s32.totalorder %v740, 0
        %vm749 = vcmp.gt.s32.totalorder %v741, 0
        %vm750 = vcmp.gt.s32.totalorder %v742, 0
        %vm751 = vcmp.gt.s32.totalorder %v743, 0
        %vm752 = vcmp.gt.s32.totalorder %v744, 0
        %vm753 = vcmp.gt.s32.totalorder %v745, 0
        %vm754 = vcmp.gt.s32.totalorder %v746, 0
        %vm755 = vcmp.gt.s32.totalorder %v747, 0
        %vm764 = vcmask 1040384
        %v765 = vrot.slane %v635, 7
        %v766 = vrot.slane %v636, 7
        %v767 = vsel %vm764, %v765, %v766
        %v768 = vrot.slane %v637, 7
        %v769 = vsel %vm764, %v766, %v768
        %v770 = vrot.slane %v638, 7
        %v771 = vsel %vm764, %v768, %v770
        %v772 = vrot.slane %v639, 7
        %v773 = vsel %vm764, %v770, %v772
        %v774 = vrot.slane %v640, 7
        %v775 = vsel %vm764, %v772, %v774
        %v776 = vrot.slane %v641, 7
        %v777 = vsel %vm764, %v774, %v776
        %v778 = vrot.slane %v642, 7
        %v779 = vsel %vm764, %v776, %v778
        %v788 = vsel %vm764, 0.0, %v765
        %v789 = vsel %vm748, 1, 0
        %v790 = vsel %vm749, 1, 0
        %v791 = vsel %vm750, 1, 0
        %v792 = vsel %vm751, 1, 0
        %v793 = vsel %vm752, 1, 0
        %v794 = vsel %vm753, 1, 0
        %v795 = vsel %vm754, 1, 0
        %v796 = vsel %vm755, 1, 0
        %vm797 = vcmp.eq.s32.totalorder %v789, 1
        %vm798 = vcmp.eq.s32.totalorder %v790, 1
        %vm799 = vcmp.eq.s32.totalorder %v791, 1
        %vm800 = vcmp.eq.s32.totalorder %v792, 1
        %vm801 = vcmp.eq.s32.totalorder %v793, 1
        %vm802 = vcmp.eq.s32.totalorder %v794, 1
        %vm803 = vcmp.eq.s32.totalorder %v795, 1
        %vm804 = vcmp.eq.s32.totalorder %v796, 1
        %v805 = vsel %vm797, %v788, 0.0
        %v806 = vsel %vm798, %v767, 0.0
        %v807 = vsel %vm799, %v769, 0.0
        %v808 = vsel %vm800, %v771, 0.0
        %v809 = vsel %vm801, %v773, 0.0
        %v810 = vsel %vm802, %v775, 0.0
        %v811 = vsel %vm803, %v777, 0.0
        %v812 = vsel %vm804, %v779, 0.0
        %vm813 = vcmp.lt.s32.totalorder %v740, 7
        %vm814 = vcmp.lt.s32.totalorder %v741, 7
        %vm815 = vcmp.lt.s32.totalorder %v742, 7
        %vm816 = vcmp.lt.s32.totalorder %v743, 7
        %vm817 = vcmp.lt.s32.totalorder %v744, 7
        %vm818 = vcmp.lt.s32.totalorder %v745, 7
        %vm819 = vcmp.lt.s32.totalorder %v746, 7
        %vm820 = vcmp.lt.s32.totalorder %v747, 7
        %vm821 = vcmask 1046528
        %v822 = vrot.slane %v635, 1
        %v823 = vrot.slane %v636, 1
        %v824 = vsel %vm821, %v822, %v823
        %v825 = vrot.slane %v637, 1
        %v826 = vsel %vm821, %v823, %v825
        %v827 = vrot.slane %v638, 1
        %v828 = vsel %vm821, %v825, %v827
        %v829 = vrot.slane %v639, 1
        %v830 = vsel %vm821, %v827, %v829
        %v831 = vrot.slane %v640, 1
        %v832 = vsel %vm821, %v829, %v831
        %v833 = vrot.slane %v641, 1
        %v834 = vsel %vm821, %v831, %v833
        %v835 = vrot.slane %v642, 1
        %v836 = vsel %vm821, %v833, %v835
        %v845 = vsel %vm821, %v835, 0.0
        %v846 = vsel %vm813, 1, 0
        %v847 = vsel %vm814, 1, 0
        %v848 = vsel %vm815, 1, 0
        %v849 = vsel %vm816, 1, 0
        %v850 = vsel %vm817, 1, 0
        %v851 = vsel %vm818, 1, 0
        %v852 = vsel %vm819, 1, 0
        %v853 = vsel %vm820, 1, 0
        %vm854 = vcmp.eq.s32.totalorder %v846, 1
        %vm855 = vcmp.eq.s32.totalorder %v847, 1
        %vm856 = vcmp.eq.s32.totalorder %v848, 1
        %vm857 = vcmp.eq.s32.totalorder %v849, 1
        %vm858 = vcmp.eq.s32.totalorder %v850, 1
        %vm859 = vcmp.eq.s32.totalorder %v851, 1
        %vm860 = vcmp.eq.s32.totalorder %v852, 1
        %vm861 = vcmp.eq.s32.totalorder %v853, 1
        %v862 = vsel %vm854, %v824, 0.0
        %v863 = vsel %vm855, %v826, 0.0
        %v864 = vsel %vm856, %v828, 0.0
        %v865 = vsel %vm857, %v830, 0.0
        %v866 = vsel %vm858, %v832, 0.0
        %v867 = vsel %vm859, %v834, 0.0
        %v868 = vsel %vm860, %v836, 0.0
        %v869 = vsel %vm861, %v845, 0.0
        %870 = vrot.lane.b32.xlu0 %v635, 16
        %v871 = vpop.permute.xlu0 %870
        %872 = vrot.lane.b32.xlu0 %v636, 16
        %v873 = vpop.permute.xlu0 %872
        %874 = vrot.lane.b32.xlu0 %v637, 16
        %v875 = vpop.permute.xlu0 %874
        %876 = vrot.lane.b32.xlu0 %v638, 16
        %v877 = vpop.permute.xlu0 %876
        %878 = vrot.lane.b32.xlu0 %v639, 16
        %v879 = vpop.permute.xlu0 %878
        %880 = vrot.lane.b32.xlu0 %v640, 16
        %v881 = vpop.permute.xlu0 %880
        %882 = vrot.lane.b32.xlu0 %v641, 16
        %v883 = vpop.permute.xlu0 %882
        %884 = vrot.lane.b32.xlu0 %v642, 16
        %v885 = vpop.permute.xlu0 %884
        %902 = vrot.lane.b32.xlu0 %v862, 32
        %v903 = vpop.permute.xlu0 %902
        %904 = vrot.lane.b32.xlu0 %v863, 32
        %v905 = vpop.permute.xlu0 %904
        %906 = vrot.lane.b32.xlu0 %v864, 32
        %v907 = vpop.permute.xlu0 %906
        %908 = vrot.lane.b32.xlu0 %v865, 32
        %v909 = vpop.permute.xlu0 %908
        %910 = vrot.lane.b32.xlu0 %v866, 32
        %v911 = vpop.permute.xlu0 %910
        %912 = vrot.lane.b32.xlu0 %v867, 32
        %v913 = vpop.permute.xlu0 %912
        %914 = vrot.lane.b32.xlu0 %v868, 32
        %v915 = vpop.permute.xlu0 %914
        %916 = vrot.lane.b32.xlu0 %v869, 32
        %v917 = vpop.permute.xlu0 %916
        %vm926 = vcmask 130048
        %v927 = vsel %vm926, %v805, %v871
        %v928 = vsel %vm926, %v806, %v873
        %v929 = vsel %vm926, %v807, %v875
        %v930 = vsel %vm926, %v808, %v877
        %v931 = vsel %vm926, %v809, %v879
        %v932 = vsel %vm926, %v810, %v881
        %v933 = vsel %vm926, %v811, %v883
        %v934 = vsel %vm926, %v812, %v885
        %vm935 = vcmask 261120
        %v936 = vsel %vm935, %v927, %v903
        %v937 = vsel %vm935, %v928, %v905
        %v938 = vsel %vm935, %v929, %v907
        %v939 = vsel %vm935, %v930, %v909
        %v940 = vsel %vm935, %v931, %v911
        %v941 = vsel %vm935, %v932, %v913
        %v942 = vsel %vm935, %v933, %v915
        %v943 = vsel %vm935, %v934, %v917
        %v944 = vpack.c.bf16 %v937, %v936
        %v945 = vpack.c.bf16 %v939, %v938
        %v946 = vpack.c.bf16 %v941, %v940
        %v947 = vpack.c.bf16 %v943, %v942
        %vm948 = vcmask 388096
        %949 = vst.msk [vmem:[#allocation2] sm:$0xf] %vm948, 0
        %vm950 = vcmask 392196
        %951 = vst.msk [vmem:[#allocation2 + $0x20] sm:$0xf0] %vm950, 0
        %vm956 = vcmask 1043456
        %v957 = vrot.slane %v944, 4
        %v958 = vrot.slane %v945, 4
        %v959 = vsel %vm956, %v957, %v958
        %v960 = vrot.slane %v946, 4
        %v961 = vsel %vm956, %v958, %v960
        %v962 = vrot.slane %v947, 4
        %v963 = vsel %vm956, %v960, %v962
        %969 = vst.msk [vmem:[#allocation2] sm:$0xf0] %vm950, %v957
        %vm970 = vcmask 392192
        %971 = vst.msk [vmem:[#allocation2 + $0x8] sm:$0xff] %vm970, %v959
        %972 = vst.msk [vmem:[#allocation2 + $0x10] sm:$0xff] %vm970, %v961
        %973 = vst.msk [vmem:[#allocation2 + $0x18] sm:$0xff] %vm970, %v963
        %974 = vst.msk [vmem:[#allocation2 + $0x20] sm:$0xf] %vm948, %v962
        %v975 = vld [vmem:[#allocation2] sm:$0xff]
        %v976 = vld [vmem:[#allocation2 + $0x8] sm:$0xff]
        %v977 = vld [vmem:[#allocation2 + $0x10] sm:$0xff]
        %v978 = vld [vmem:[#allocation2 + $0x18] sm:$0xff]
        %v979 = vld [vmem:[%s4] sm:$0xf]
        %v980 = vld [vmem:[%s4 + $0x4] sm:$0xf]
        %v981 = vld [vmem:[%s4 + $0x8] sm:$0xf]
        %v982 = vld [vmem:[%s4 + $0xc] sm:$0xf]
        %v983 = vld [vmem:[%s4 + $0x10] sm:$0xf]
        %v984 = vld [vmem:[%s4 + $0x14] sm:$0xf]
        %s985 = scalar_lea.vmem %s4, 24
        %v986 = vld [vmem:[%s985] sm:$0xf]
        %v987 = vld [vmem:[%s985 + $0x4] sm:$0xf]
        %v988 = vld [vmem:[%s985 + $0x8] sm:$0xf]
        %v989 = vld [vmem:[%s985 + $0xc] sm:$0xf]
        %v990 = vld [vmem:[%s985 + $0x10] sm:$0xf]
        %v991 = vld [vmem:[%s985 + $0x14] sm:$0xf]
        %v998 = vunpack.c.l.b16 %v986
        %v999 = vunpack.c.l.b16 %v987
        %v1000 = vunpack.c.l.b16 %v988
        %v1001 = vunpack.c.l.b16 %v989
        %v1002 = vunpack.c.l.b16 %v990
        %v1003 = vunpack.c.l.b16 %v991
        %v1004 = vpack.c.b16 %v999, %v998
        %v1005 = vpack.c.b16 %v1001, %v1000
        %v1006 = vpack.c.b16 %v1003, %v1002
        %v1011 = vsel %vm970, %v944, 0
        %v1014 = vsel %vm970, %v945, 0
        %v1017 = vsel %vm970, %v946, 0
        %v1020 = vsel %vm970, %v947, 0
        %1022 = vmatprep.subr.bf16.mxu0 0
        %1023 = vmatpush1.bf16.msra.mxu0 %v1004
        %1024 = vmatprep.subr.bf16.mxu0 0
        %1025 = vmatpush1.bf16.msra.mxu0 %v1005
        %1026 = vmatprep.subr.bf16.mxu0 0
        %1027 = vmatpush1.bf16.msra.mxu0 %v1006
        %1028 = vmatprep.subr.bf16.mxu0 0
        %1029 = vmatpush1.bf16.msra.mxu0 0
        %1030 = vmatprep.subr.bf16.mxu0 0
        %1031 = vmatpush1.bf16.msra.mxu0 0
        %1032 = vmatprep.subr.bf16.mxu0 0
        %1033 = vmatpush1.bf16.msra.mxu0 0
        %1034 = vmatprep.subr.bf16.mxu0 0
        %1035 = vmatpush1.bf16.msra.mxu0 0
        %1036 = vmatprep.subr.bf16.mxu0 0
        %1037 = vmatpush1.bf16.msra.mxu0 0
        %1038 = vmatprep.subr.bf16.mxu0 0
        %1039 = vmatpush1.bf16.msra.mxu0 0
        %1040 = vmatprep.subr.bf16.mxu0 0
        %1041 = vmatpush1.bf16.msra.mxu0 0
        %1042 = vmatprep.subr.bf16.mxu0 0
        %1043 = vmatpush1.bf16.msra.mxu0 0
        %1044 = vmatprep.subr.bf16.mxu0 0
        %1045 = vmatpush1.bf16.msra.mxu0 0
        %1046 = vmatprep.subr.bf16.mxu0 0
        %1047 = vmatpush1.bf16.msra.mxu0 0
        %1048 = vmatprep.subr.bf16.mxu0 0
        %1049 = vmatpush1.bf16.msra.mxu0 0
        %1050 = vmatprep.subr.bf16.mxu0 0
        %1051 = vmatpush1.bf16.msra.mxu0 0
        %1052 = vmatprep.subr.bf16.mxu0 0
        %1053 = vmatpush1.bf16.msra.mxu0 0
        %1054 = vmatprep.mubr.bf16.mxu0 0
        %1055 = vmatmul.mubr.bf16.gmra.mrb[0].mxu0 %v1011
        %v1056 = vpop.f32.mrb[0].mxu0
        %v1057 = vadd.f32 0.0, %v1056
        %v1058 = vpop.f32.mrb[0].mxu0
        %v1059 = vpop.f32.mrb[0].mxu0
        %v1060 = vadd.f32 0.0, %v1059
        %v1061 = vpop.f32.mrb[0].mxu0
        %1062 = vmatprep.mubr.bf16.mxu0 0
        %1063 = vmatmul.mubr.bf16.gmra.mrb[0].mxu0 %v1014
        %v1064 = vpop.f32.mrb[0].mxu0
        %v1065 = vadd.f32 0.0, %v1064
        %v1066 = vpop.f32.mrb[0].mxu0
        %v1067 = vpop.f32.mrb[0].mxu0
        %v1068 = vadd.f32 0.0, %v1067
        %v1069 = vpop.f32.mrb[0].mxu0
        %1070 = vmatprep.mubr.bf16.mxu0 0
        %1071 = vmatmul.mubr.bf16.gmra.mrb[0].mxu0 %v1017
        %v1072 = vpop.f32.mrb[0].mxu0
        %v1073 = vadd.f32 0.0, %v1072
        %v1074 = vpop.f32.mrb[0].mxu0
        %v1075 = vpop.f32.mrb[0].mxu0
        %v1076 = vadd.f32 0.0, %v1075
        %v1077 = vpop.f32.mrb[0].mxu0
        %1078 = vmatprep.mubr.bf16.mxu0 0
        %1079 = vmatmul.mubr.bf16.gmra.mrb[0].mxu0 %v1020
        %v1080 = vpop.f32.mrb[0].mxu0
        %v1081 = vadd.f32 0.0, %v1080
        %v1082 = vpop.f32.mrb[0].mxu0
        %v1083 = vpop.f32.mrb[0].mxu0
        %v1084 = vadd.f32 0.0, %v1083
        %v1085 = vpop.f32.mrb[0].mxu0
        %1086 = vdwg.mxu0
        %v1093 = vunpack.c.l.b16 %v979
        %v1094 = vunpack.c.l.b16 %v980
        %v1095 = vunpack.c.l.b16 %v981
        %v1096 = vunpack.c.l.b16 %v982
        %v1097 = vunpack.c.l.b16 %v983
        %v1098 = vunpack.c.l.b16 %v984
        %v1099 = vpack.c.b16 %v1094, %v1093
        %v1100 = vpack.c.b16 %v1096, %v1095
        %v1101 = vpack.c.b16 %v1098, %v1097
        %v1106 = vsel %vm970, %v975, 0
        %v1109 = vsel %vm970, %v976, 0
        %v1112 = vsel %vm970, %v977, 0
        %v1115 = vsel %vm970, %v978, 0
        %1117 = vmatprep.subr.bf16.mxu0 0
        %1118 = vmatpush1.bf16.msra.mxu0 %v1099
        %1119 = vmatprep.subr.bf16.mxu0 0
        %1120 = vmatpush1.bf16.msra.mxu0 %v1100
        %1121 = vmatprep.subr.bf16.mxu0 0
        %1122 = vmatpush1.bf16.msra.mxu0 %v1101
        %1123 = vmatprep.subr.bf16.mxu0 0
        %1124 = vmatpush1.bf16.msra.mxu0 0
        %1125 = vmatprep.subr.bf16.mxu0 0
        %1126 = vmatpush1.bf16.msra.mxu0 0
        %1127 = vmatprep.subr.bf16.mxu0 0
        %1128 = vmatpush1.bf16.msra.mxu0 0
        %1129 = vmatprep.subr.bf16.mxu0 0
        %1130 = vmatpush1.bf16.msra.mxu0 0
        %1131 = vmatprep.subr.bf16.mxu0 0
        %1132 = vmatpush1.bf16.msra.mxu0 0
        %1133 = vmatprep.subr.bf16.mxu0 0
        %1134 = vmatpush1.bf16.msra.mxu0 0
        %1135 = vmatprep.subr.bf16.mxu0 0
        %1136 = vmatpush1.bf16.msra.mxu0 0
        %1137 = vmatprep.subr.bf16.mxu0 0
        %1138 = vmatpush1.bf16.msra.mxu0 0
        %1139 = vmatprep.subr.bf16.mxu0 0
        %1140 = vmatpush1.bf16.msra.mxu0 0
        %1141 = vmatprep.subr.bf16.mxu0 0
        %1142 = vmatpush1.bf16.msra.mxu0 0
        %1143 = vmatprep.subr.bf16.mxu0 0
        %1144 = vmatpush1.bf16.msra.mxu0 0
        %1145 = vmatprep.subr.bf16.mxu0 0
        %1146 = vmatpush1.bf16.msra.mxu0 0
        %1147 = vmatprep.subr.bf16.mxu0 0
        %1148 = vmatpush1.bf16.msra.mxu0 0
        %1149 = vmatprep.mubr.bf16.mxu0 0
        %1150 = vmatmul.mubr.bf16.gmra.mrb[0].mxu0 %v1106
        %v1151 = vpop.f32.mrb[0].mxu0
        %v1152 = vadd.f32 %v1057, %v1151
        %v1153 = vpop.f32.mrb[0].mxu0
        %v1154 = vpop.f32.mrb[0].mxu0
        %v1155 = vadd.f32 %v1060, %v1154
        %v1156 = vpop.f32.mrb[0].mxu0
        %1157 = vmatprep.mubr.bf16.mxu0 0
        %1158 = vmatmul.mubr.bf16.gmra.mrb[0].mxu0 %v1109
        %v1159 = vpop.f32.mrb[0].mxu0
        %v1160 = vadd.f32 %v1065, %v1159
        %v1161 = vpop.f32.mrb[0].mxu0
        %v1162 = vpop.f32.mrb[0].mxu0
        %v1163 = vadd.f32 %v1068, %v1162
        %v1164 = vpop.f32.mrb[0].mxu0
        %1165 = vmatprep.mubr.bf16.mxu0 0
        %1166 = vmatmul.mubr.bf16.gmra.mrb[0].mxu0 %v1112
        %v1167 = vpop.f32.mrb[0].mxu0
        %v1168 = vadd.f32 %v1073, %v1167
        %v1169 = vpop.f32.mrb[0].mxu0
        %v1170 = vpop.f32.mrb[0].mxu0
        %v1171 = vadd.f32 %v1076, %v1170
        %v1172 = vpop.f32.mrb[0].mxu0
        %1173 = vmatprep.mubr.bf16.mxu0 0
        %1174 = vmatmul.mubr.bf16.gmra.mrb[0].mxu0 %v1115
        %v1175 = vpop.f32.mrb[0].mxu0
        %v1176 = vadd.f32 %v1081, %v1175
        %v1177 = vpop.f32.mrb[0].mxu0
        %v1178 = vpop.f32.mrb[0].mxu0
        %v1179 = vadd.f32 %v1084, %v1178
        %v1180 = vpop.f32.mrb[0].mxu0
        %1181 = vdwg.mxu0
        %v1182 = vld [vmem:[#allocation2 + $0x8] sm:$0xff]
        %v1183 = vld [vmem:[#allocation2 + $0x10] sm:$0xff]
        %v1184 = vld [vmem:[#allocation2 + $0x18] sm:$0xff]
        %v1185 = vld [vmem:[#allocation2 + $0x20] sm:$0xff]
        %s1186 = scalar_lea.vmem %s4, 48
        %v1187 = vld [vmem:[%s1186] sm:$0xf]
        %v1188 = vld [vmem:[%s1186 + $0x4] sm:$0xf]
        %v1189 = vld [vmem:[%s1186 + $0x8] sm:$0xf]
        %v1190 = vld [vmem:[%s1186 + $0xc] sm:$0xf]
        %v1191 = vld [vmem:[%s1186 + $0x10] sm:$0xf]
        %v1192 = vld [vmem:[%s1186 + $0x14] sm:$0xf]
        %v1199 = vunpack.c.l.b16 %v1187
        %v1200 = vunpack.c.l.b16 %v1188
        %v1201 = vunpack.c.l.b16 %v1189
        %v1202 = vunpack.c.l.b16 %v1190
        %v1203 = vunpack.c.l.b16 %v1191
        %v1204 = vunpack.c.l.b16 %v1192
        %v1205 = vpack.c.b16 %v1200, %v1199
        %v1206 = vpack.c.b16 %v1202, %v1201
        %v1207 = vpack.c.b16 %v1204, %v1203
        %v1212 = vsel %vm970, %v1182, 0
        %v1215 = vsel %vm970, %v1183, 0
        %v1218 = vsel %vm970, %v1184, 0
        %v1221 = vsel %vm970, %v1185, 0
        %1223 = vmatprep.subr.bf16.mxu0 0
        %1224 = vmatpush1.bf16.msra.mxu0 %v1205
        %1225 = vmatprep.subr.bf16.mxu0 0
        %1226 = vmatpush1.bf16.msra.mxu0 %v1206
        %1227 = vmatprep.subr.bf16.mxu0 0
        %1228 = vmatpush1.bf16.msra.mxu0 %v1207
        %1229 = vmatprep.subr.bf16.mxu0 0
        %1230 = vmatpush1.bf16.msra.mxu0 0
        %1231 = vmatprep.subr.bf16.mxu0 0
        %1232 = vmatpush1.bf16.msra.mxu0 0
        %1233 = vmatprep.subr.bf16.mxu0 0
        %1234 = vmatpush1.bf16.msra.mxu0 0
        %1235 = vmatprep.subr.bf16.mxu0 0
        %1236 = vmatpush1.bf16.msra.mxu0 0
        %1237 = vmatprep.subr.bf16.mxu0 0
        %1238 = vmatpush1.bf16.msra.mxu0 0
        %1239 = vmatprep.subr.bf16.mxu0 0
        %1240 = vmatpush1.bf16.msra.mxu0 0
        %1241 = vmatprep.subr.bf16.mxu0 0
        %1242 = vmatpush1.bf16.msra.mxu0 0
        %1243 = vmatprep.subr.bf16.mxu0 0
        %1244 = vmatpush1.bf16.msra.mxu0 0
        %1245 = vmatprep.subr.bf16.mxu0 0
        %1246 = vmatpush1.bf16.msra.mxu0 0
        %1247 = vmatprep.subr.bf16.mxu0 0
        %1248 = vmatpush1.bf16.msra.mxu0 0
        %1249 = vmatprep.subr.bf16.mxu0 0
        %1250 = vmatpush1.bf16.msra.mxu0 0
        %1251 = vmatprep.subr.bf16.mxu0 0
        %1252 = vmatpush1.bf16.msra.mxu0 0
        %1253 = vmatprep.subr.bf16.mxu0 0
        %1254 = vmatpush1.bf16.msra.mxu0 0
        %1255 = vmatprep.mubr.bf16.mxu0 0
        %1256 = vmatmul.mubr.bf16.gmra.mrb[0].mxu0 %v1212
        %v1257 = vpop.f32.mrb[0].mxu0
        %v1258 = vadd.f32 0.0, %v1257
        %v1259 = vpop.f32.mrb[0].mxu0
        %v1260 = vpop.f32.mrb[0].mxu0
        %v1261 = vadd.f32 0.0, %v1260
        %v1262 = vpop.f32.mrb[0].mxu0
        %1263 = vmatprep.mubr.bf16.mxu0 0
        %1264 = vmatmul.mubr.bf16.gmra.mrb[0].mxu0 %v1215
        %v1265 = vpop.f32.mrb[0].mxu0
        %v1266 = vadd.f32 0.0, %v1265
        %v1267 = vpop.f32.mrb[0].mxu0
        %v1268 = vpop.f32.mrb[0].mxu0
        %v1269 = vadd.f32 0.0, %v1268
        %v1270 = vpop.f32.mrb[0].mxu0
        %1271 = vmatprep.mubr.bf16.mxu0 0
        %1272 = vmatmul.mubr.bf16.gmra.mrb[0].mxu0 %v1218
        %v1273 = vpop.f32.mrb[0].mxu0
        %v1274 = vadd.f32 0.0, %v1273
        %v1275 = vpop.f32.mrb[0].mxu0
        %v1276 = vpop.f32.mrb[0].mxu0
        %v1277 = vadd.f32 0.0, %v1276
        %v1278 = vpop.f32.mrb[0].mxu0
        %1279 = vmatprep.mubr.bf16.mxu0 0
        %1280 = vmatmul.mubr.bf16.gmra.mrb[0].mxu0 %v1221
        %v1281 = vpop.f32.mrb[0].mxu0
        %v1282 = vadd.f32 0.0, %v1281
        %v1283 = vpop.f32.mrb[0].mxu0
        %v1284 = vpop.f32.mrb[0].mxu0
        %v1285 = vadd.f32 0.0, %v1284
        %v1286 = vpop.f32.mrb[0].mxu0
        %1287 = vdwg.mxu0
        %v1288 = vadd.f32 %v1152, %v1258
        %v1289 = vadd.f32 %v1155, %v1261
        %v1290 = vadd.f32 %v1160, %v1266
        %v1291 = vadd.f32 %v1163, %v1269
        %v1292 = vadd.f32 %v1168, %v1274
        %v1293 = vadd.f32 %v1171, %v1277
        %v1294 = vadd.f32 %v1176, %v1282
        %v1295 = vadd.f32 %v1179, %v1285
        %v1296 = vld [vmem:[%s5] sm:$0x1]
        %v1298 = vlaneseq
        %v1299 = vshrl.u32 %v1298, 7
        %v1300 = vsub.s32 0, %v1299
        %v1301 = vrot.slane %v1296, %v1300
        %v1303 = vmul.f32 %v1288, %v1301
        %v1304 = vmul.f32 %v1289, %v1301
        %v1305 = vmul.f32 %v1290, %v1301
        %v1306 = vmul.f32 %v1291, %v1301
        %v1307 = vmul.f32 %v1292, %v1301
        %v1308 = vmul.f32 %v1293, %v1301
        %v1309 = vmul.f32 %v1294, %v1301
        %v1310 = vmul.f32 %v1295, %v1301
        %v1311 = vld [vmem:[%s6] sm:$0x1]
        %v1313 = vlaneseq
        %v1314 = vshrl.u32 %v1313, 7
        %v1315 = vsub.s32 0, %v1314
        %v1316 = vrot.slane %v1311, %v1315
        %v1318 = vadd.f32 %v1303, %v1316
        %v1319 = vadd.f32 %v1304, %v1316
        %v1320 = vadd.f32 %v1305, %v1316
        %v1321 = vadd.f32 %v1306, %v1316
        %v1322 = vadd.f32 %v1307, %v1316
        %v1323 = vadd.f32 %v1308, %v1316
        %v1324 = vadd.f32 %v1309, %v1316
        %v1325 = vadd.f32 %v1310, %v1316
        %vm1326 = vcmp.ge.f32.partialorder %v1318, 0.0
        %vm1327 = vcmp.ge.f32.partialorder %v1319, 0.0
        %vm1328 = vcmp.ge.f32.partialorder %v1320, 0.0
        %vm1329 = vcmp.ge.f32.partialorder %v1321, 0.0
        %vm1330 = vcmp.ge.f32.partialorder %v1322, 0.0
        %vm1331 = vcmp.ge.f32.partialorder %v1323, 0.0
        %vm1332 = vcmp.ge.f32.partialorder %v1324, 0.0
        %vm1333 = vcmp.ge.f32.partialorder %v1325, 0.0
        %v1334 = vmul.f32 %v1318, 0.001
        %v1335 = vmul.f32 %v1319, 0.001
        %v1336 = vmul.f32 %v1320, 0.001
        %v1337 = vmul.f32 %v1321, 0.001
        %v1338 = vmul.f32 %v1322, 0.001
        %v1339 = vmul.f32 %v1323, 0.001
        %v1340 = vmul.f32 %v1324, 0.001
        %v1341 = vmul.f32 %v1325, 0.001
        %v1342 = vsel %vm1326, %v1318, %v1334
        %v1343 = vsel %vm1327, %v1319, %v1335
        %v1344 = vsel %vm1328, %v1320, %v1336
        %v1345 = vsel %vm1329, %v1321, %v1337
        %v1346 = vsel %vm1330, %v1322, %v1338
        %v1347 = vsel %vm1331, %v1323, %v1339
        %v1348 = vsel %vm1332, %v1324, %v1340
        %v1349 = vsel %vm1333, %v1325, %v1341
        %v1350 = vsel %vm926, %v1342, 0.0
        %v1351 = vsel %vm926, %v1343, 0.0
        %v1352 = vadd.f32 %v1350, %v1351
        %v1353 = vsel %vm926, %v1344, 0.0
        %v1354 = vadd.f32 %v1352, %v1353
        %v1355 = vsel %vm926, %v1345, 0.0
        %v1356 = vadd.f32 %v1354, %v1355
        %v1357 = vsel %vm926, %v1346, 0.0
        %v1358 = vadd.f32 %v1356, %v1357
        %v1359 = vsel %vm926, %v1347, 0.0
        %v1360 = vadd.f32 %v1358, %v1359
        %v1361 = vsel %vm926, %v1348, 0.0
        %v1362 = vadd.f32 %v1360, %v1361
        %v1363 = vsel %vm926, %v1349, 0.0
        %v1364 = vadd.f32 %v1362, %v1363
        %v1365 = vrot.slane %v1364, 4
        %v1366 = vadd.f32 %v1364, %v1365
        %v1367 = vrot.slane %v1366, 2
        %v1368 = vadd.f32 %v1366, %v1367
        %v1369 = vrot.slane %v1368, 1
        %v1370 = vadd.f32 %v1368, %v1369
        %v1371 = vrcp.pop 64.0
        %v1372 = vmul.f32 %v1370, %v1371
        %1373 = vst.msk [vmem:[#allocation3] sm:$0xff] %vm926, %v1342
        %1374 = vst.msk [vmem:[#allocation3 + $0x8] sm:$0xff] %vm926, %v1343
        %1375 = vst.msk [vmem:[#allocation3 + $0x10] sm:$0xff] %vm926, %v1344
        %1376 = vst.msk [vmem:[#allocation3 + $0x18] sm:$0xff] %vm926, %v1345
        %1377 = vst.msk [vmem:[#allocation3 + $0x20] sm:$0xff] %vm926, %v1346
        %1378 = vst.msk [vmem:[#allocation3 + $0x28] sm:$0xff] %vm926, %v1347
        %1379 = vst.msk [vmem:[#allocation3 + $0x30] sm:$0xff] %vm926, %v1348
        %1380 = vst.msk [vmem:[#allocation3 + $0x38] sm:$0xff] %vm926, %v1349
        %v1381 = vld [vmem:[%s7] sm:$0xff]
        %v1382 = vld [vmem:[%s7 + $0x8] sm:$0xff]
        %v1383 = vld [vmem:[%s8] sm:$0x1]
        %v1385 = vsel %vm926, %v1372, 0
        %1387 = vmatprep.subr.mxu0 0.0
        %1388 = vmatpush1.msra.mxu0 %v1381
        %1389 = vmatprep.subr.mxu0 0.0
        %1390 = vmatpush1.msra.mxu0 %v1382
        %1391 = vmatprep.subr.mxu0 0.0
        %1392 = vmatpush1.msra.mxu0 0.0
        %1393 = vmatprep.subr.mxu0 0.0
        %1394 = vmatpush1.msra.mxu0 0.0
        %1395 = vmatprep.subr.mxu0 0.0
        %1396 = vmatpush1.msra.mxu0 0.0
        %1397 = vmatprep.subr.mxu0 0.0
        %1398 = vmatpush1.msra.mxu0 0.0
        %1399 = vmatprep.subr.mxu0 0.0
        %1400 = vmatpush1.msra.mxu0 0.0
        %1401 = vmatprep.subr.mxu0 0.0
        %1402 = vmatpush1.msra.mxu0 0.0
        %1403 = vmatprep.subr.mxu0 0.0
        %1404 = vmatpush1.msra.mxu0 0.0
        %1405 = vmatprep.subr.mxu0 0.0
        %1406 = vmatpush1.msra.mxu0 0.0
        %1407 = vmatprep.subr.mxu0 0.0
        %1408 = vmatpush1.msra.mxu0 0.0
        %1409 = vmatprep.subr.mxu0 0.0
        %1410 = vmatpush1.msra.mxu0 0.0
        %1411 = vmatprep.subr.mxu0 0.0
        %1412 = vmatpush1.msra.mxu0 0.0
        %1413 = vmatprep.subr.mxu0 0.0
        %1414 = vmatpush1.msra.mxu0 0.0
        %1415 = vmatprep.subr.mxu0 0.0
        %1416 = vmatpush1.msra.mxu0 0.0
        %1417 = vmatprep.subr.mxu0 0.0
        %1418 = vmatpush1.msra.mxu0 0.0
        %1419 = vmatprep.subr.mxu0 0.0
        %1420 = vmatpush1.msra.mxu0 0.0
        %1421 = vmatprep.subr.mxu0 0.0
        %1422 = vmatpush1.msra.mxu0 0.0
        %1423 = vmatprep.subr.mxu0 0.0
        %1424 = vmatpush1.msra.mxu0 0.0
        %1425 = vmatprep.subr.mxu0 0.0
        %1426 = vmatpush1.msra.mxu0 0.0
        %1427 = vmatprep.subr.mxu0 0.0
        %1428 = vmatpush1.msra.mxu0 0.0
        %1429 = vmatprep.subr.mxu0 0.0
        %1430 = vmatpush1.msra.mxu0 0.0
        %1431 = vmatprep.subr.mxu0 0.0
        %1432 = vmatpush1.msra.mxu0 0.0
        %1433 = vmatprep.subr.mxu0 0.0
        %1434 = vmatpush1.msra.mxu0 0.0
        %1435 = vmatprep.subr.mxu0 0.0
        %1436 = vmatpush1.msra.mxu0 0.0
        %1437 = vmatprep.subr.mxu0 0.0
        %1438 = vmatpush1.msra.mxu0 0.0
        %1439 = vmatprep.subr.mxu0 0.0
        %1440 = vmatpush1.msra.mxu0 0.0
        %1441 = vmatprep.subr.mxu0 0.0
        %1442 = vmatpush1.msra.mxu0 0.0
        %1443 = vmatprep.subr.mxu0 0.0
        %1444 = vmatpush1.msra.mxu0 0.0
        %1445 = vmatprep.subr.mxu0 0.0
        %1446 = vmatpush1.msra.mxu0 0.0
        %1447 = vmatprep.subr.mxu0 0.0
        %1448 = vmatpush1.msra.mxu0 0.0
        %1449 = vmatprep.subr.mxu0 0.0
        %1450 = vmatpush1.msra.mxu0 0.0
        %1451 = vmatprep.mubr.f32.mxu0 0.0
        %1452 = vmatmul.mubr.f32.gmra.mrb[0].mxu0 %v1385
        %v1453 = vpop.f32.mrb[0].mxu0
        %v1454 = vadd.f32 %v1383, %v1453
        %v1455 = vpop.f32.mrb[0].mxu0
        %1456 = vdwg.mxu0
        %v1457 = vmax.f32 %v1454, 0.0
        %v1458 = vld [vmem:[%s9] sm:$0xff]
        %v1459 = vld [vmem:[%s9 + $0x8] sm:$0xff]
        %v1460 = vld [vmem:[%s9 + $0x10] sm:$0xff]
        %v1461 = vld [vmem:[%s9 + $0x18] sm:$0xff]
        %v1462 = vld [vmem:[%s9 + $0x20] sm:$0xff]
        %v1463 = vld [vmem:[%s9 + $0x28] sm:$0xff]
        %v1464 = vld [vmem:[%s9 + $0x30] sm:$0xff]
        %v1465 = vld [vmem:[%s9 + $0x38] sm:$0xff]
        %v1466 = vld [vmem:[%s10] sm:$0x1]
        %v1468 = vsel %vm511, %v1457, 0
        %1470 = vmatprep.subr.mxu0 0.0
        %1471 = vmatpush1.msra.mxu0 %v1458
        %1472 = vmatprep.subr.mxu0 0.0
        %1473 = vmatpush1.msra.mxu0 %v1459
        %1474 = vmatprep.subr.mxu0 0.0
        %1475 = vmatpush1.msra.mxu0 %v1460
        %1476 = vmatprep.subr.mxu0 0.0
        %1477 = vmatpush1.msra.mxu0 %v1461
        %1478 = vmatprep.subr.mxu0 0.0
        %1479 = vmatpush1.msra.mxu0 %v1462
        %1480 = vmatprep.subr.mxu0 0.0
        %1481 = vmatpush1.msra.mxu0 %v1463
        %1482 = vmatprep.subr.mxu0 0.0
        %1483 = vmatpush1.msra.mxu0 %v1464
        %1484 = vmatprep.subr.mxu0 0.0
        %1485 = vmatpush1.msra.mxu0 %v1465
        %1486 = vmatprep.subr.mxu0 0.0
        %1487 = vmatpush1.msra.mxu0 0.0
        %1488 = vmatprep.subr.mxu0 0.0
        %1489 = vmatpush1.msra.mxu0 0.0
        %1490 = vmatprep.subr.mxu0 0.0
        %1491 = vmatpush1.msra.mxu0 0.0
        %1492 = vmatprep.subr.mxu0 0.0
        %1493 = vmatpush1.msra.mxu0 0.0
        %1494 = vmatprep.subr.mxu0 0.0
        %1495 = vmatpush1.msra.mxu0 0.0
        %1496 = vmatprep.subr.mxu0 0.0
        %1497 = vmatpush1.msra.mxu0 0.0
        %1498 = vmatprep.subr.mxu0 0.0
        %1499 = vmatpush1.msra.mxu0 0.0
        %1500 = vmatprep.subr.mxu0 0.0
        %1501 = vmatpush1.msra.mxu0 0.0
        %1502 = vmatprep.subr.mxu0 0.0
        %1503 = vmatpush1.msra.mxu0 0.0
        %1504 = vmatprep.subr.mxu0 0.0
        %1505 = vmatpush1.msra.mxu0 0.0
        %1506 = vmatprep.subr.mxu0 0.0
        %1507 = vmatpush1.msra.mxu0 0.0
        %1508 = vmatprep.subr.mxu0 0.0
        %1509 = vmatpush1.msra.mxu0 0.0
        %1510 = vmatprep.subr.mxu0 0.0
        %1511 = vmatpush1.msra.mxu0 0.0
        %1512 = vmatprep.subr.mxu0 0.0
        %1513 = vmatpush1.msra.mxu0 0.0
        %1514 = vmatprep.subr.mxu0 0.0
        %1515 = vmatpush1.msra.mxu0 0.0
        %1516 = vmatprep.subr.mxu0 0.0
        %1517 = vmatpush1.msra.mxu0 0.0
        %1518 = vmatprep.subr.mxu0 0.0
        %1519 = vmatpush1.msra.mxu0 0.0
        %1520 = vmatprep.subr.mxu0 0.0
        %1521 = vmatpush1.msra.mxu0 0.0
        %1522 = vmatprep.subr.mxu0 0.0
        %1523 = vmatpush1.msra.mxu0 0.0
        %1524 = vmatprep.subr.mxu0 0.0
        %1525 = vmatpush1.msra.mxu0 0.0
        %1526 = vmatprep.subr.mxu0 0.0
        %1527 = vmatpush1.msra.mxu0 0.0
        %1528 = vmatprep.subr.mxu0 0.0
        %1529 = vmatpush1.msra.mxu0 0.0
        %1530 = vmatprep.subr.mxu0 0.0
        %1531 = vmatpush1.msra.mxu0 0.0
        %1532 = vmatprep.subr.mxu0 0.0
        %1533 = vmatpush1.msra.mxu0 0.0
        %1534 = vmatprep.mubr.f32.mxu0 0.0
        %1535 = vmatmul.mubr.f32.gmra.mrb[0].mxu0 %v1468
        %v1536 = vpop.f32.mrb[0].mxu0
        %v1537 = vadd.f32 %v1466, %v1536
        %v1538 = vpop.f32.mrb[0].mxu0
        %1539 = vdwg.mxu0
        %v1540 = vsub.f32 0.0, %v1537
        %v1541 = vmul.f32 %v1540, 1.442695
        %v1542 = vpow.pop %v1541
        %v1543 = vadd.f32 %v1542, 1.0
        %v1544 = vrcp.pop %v1543
        %v1545 = vmul.f32 1.0, %v1544
        %v1546 = vld [vmem:[#allocation3] sm:$0xff]
        %v1547 = vld [vmem:[#allocation3 + $0x8] sm:$0xff]
        %v1548 = vld [vmem:[#allocation3 + $0x10] sm:$0xff]
        %v1549 = vld [vmem:[#allocation3 + $0x18] sm:$0xff]
        %v1550 = vld [vmem:[#allocation3 + $0x20] sm:$0xff]
        %v1551 = vld [vmem:[#allocation3 + $0x28] sm:$0xff]
        %v1552 = vld [vmem:[#allocation3 + $0x30] sm:$0xff]
        %v1553 = vld [vmem:[#allocation3 + $0x38] sm:$0xff]
        %v1554 = vlaneseq
        %v1555 = vshrl.u32 %v1554, 7
        %v1556 = vsub.s32 0, %v1555
        %v1557 = vrot.slane %v1545, %v1556
        %v1558 = vmul.f32 %v1546, %v1557
        %v1559 = vmul.f32 %v1547, %v1557
        %v1560 = vmul.f32 %v1548, %v1557
        %v1561 = vmul.f32 %v1549, %v1557
        %v1562 = vmul.f32 %v1550, %v1557
        %v1563 = vmul.f32 %v1551, %v1557
        %v1564 = vmul.f32 %v1552, %v1557
        %v1565 = vmul.f32 %v1553, %v1557
        %v1566 = vpack.c.bf16 %v1559, %v1558
        %v1567 = vpack.c.bf16 %v1561, %v1560
        %v1568 = vpack.c.bf16 %v1563, %v1562
        %v1569 = vpack.c.bf16 %v1565, %v1564
        %v1570 = vld [vmem:[%s11] sm:$0xf]
        %v1571 = vld [vmem:[%s11 + $0x4] sm:$0xf]
        %v1574 = vunpack.c.l.b16 %v1570
        %v1575 = vunpack.c.l.b16 %v1571
        %v1576 = vpack.c.b16 %v1575, %v1574
        %v1579 = vsel %vm926, %v1566, 0
        %v1582 = vsel %vm926, %v1567, 0
        %v1585 = vsel %vm926, %v1568, 0
        %v1588 = vsel %vm926, %v1569, 0
        %1590 = vmatprep.subr.bf16.mxu0 0
        %1591 = vmatpush1.bf16.msra.mxu0 %v1576
        %1592 = vmatprep.subr.bf16.mxu0 0
        %1593 = vmatpush1.bf16.msra.mxu0 0
        %1594 = vmatprep.subr.bf16.mxu0 0
        %1595 = vmatpush1.bf16.msra.mxu0 0
        %1596 = vmatprep.subr.bf16.mxu0 0
        %1597 = vmatpush1.bf16.msra.mxu0 0
        %1598 = vmatprep.subr.bf16.mxu0 0
        %1599 = vmatpush1.bf16.msra.mxu0 0
        %1600 = vmatprep.subr.bf16.mxu0 0
        %1601 = vmatpush1.bf16.msra.mxu0 0
        %1602 = vmatprep.subr.bf16.mxu0 0
        %1603 = vmatpush1.bf16.msra.mxu0 0
        %1604 = vmatprep.subr.bf16.mxu0 0
        %1605 = vmatpush1.bf16.msra.mxu0 0
        %1606 = vmatprep.subr.bf16.mxu0 0
        %1607 = vmatpush1.bf16.msra.mxu0 0
        %1608 = vmatprep.subr.bf16.mxu0 0
        %1609 = vmatpush1.bf16.msra.mxu0 0
        %1610 = vmatprep.subr.bf16.mxu0 0
        %1611 = vmatpush1.bf16.msra.mxu0 0
        %1612 = vmatprep.subr.bf16.mxu0 0
        %1613 = vmatpush1.bf16.msra.mxu0 0
        %1614 = vmatprep.subr.bf16.mxu0 0
        %1615 = vmatpush1.bf16.msra.mxu0 0
        %1616 = vmatprep.subr.bf16.mxu0 0
        %1617 = vmatpush1.bf16.msra.mxu0 0
        %1618 = vmatprep.subr.bf16.mxu0 0
        %1619 = vmatpush1.bf16.msra.mxu0 0
        %1620 = vmatprep.subr.bf16.mxu0 0
        %1621 = vmatpush1.bf16.msra.mxu0 0
        %1622 = vmatprep.mubr.bf16.mxu0 0
        %1623 = vmatmul.mubr.bf16.gmra.mrb[0].mxu0 %v1579
        %v1624 = vpop.f32.mrb[0].mxu0
        %v1625 = vadd.f32 0.0, %v1624
        %v1626 = vpop.f32.mrb[0].mxu0
        %v1627 = vpop.f32.mrb[0].mxu0
        %v1628 = vadd.f32 0.0, %v1627
        %v1629 = vpop.f32.mrb[0].mxu0
        %1630 = vmatprep.mubr.bf16.mxu0 0
        %1631 = vmatmul.mubr.bf16.gmra.mrb[0].mxu0 %v1582
        %v1632 = vpop.f32.mrb[0].mxu0
        %v1633 = vadd.f32 0.0, %v1632
        %v1634 = vpop.f32.mrb[0].mxu0
        %v1635 = vpop.f32.mrb[0].mxu0
        %v1636 = vadd.f32 0.0, %v1635
        %v1637 = vpop.f32.mrb[0].mxu0
        %1638 = vmatprep.mubr.bf16.mxu0 0
        %1639 = vmatmul.mubr.bf16.gmra.mrb[0].mxu0 %v1585
        %v1640 = vpop.f32.mrb[0].mxu0
        %v1641 = vadd.f32 0.0, %v1640
        %v1642 = vpop.f32.mrb[0].mxu0
        %v1643 = vpop.f32.mrb[0].mxu0
        %v1644 = vadd.f32 0.0, %v1643
        %v1645 = vpop.f32.mrb[0].mxu0
        %1646 = vmatprep.mubr.bf16.mxu0 0
        %1647 = vmatmul.mubr.bf16.gmra.mrb[0].mxu0 %v1588
        %v1648 = vpop.f32.mrb[0].mxu0
        %v1649 = vadd.f32 0.0, %v1648
        %v1650 = vpop.f32.mrb[0].mxu0
        %v1651 = vpop.f32.mrb[0].mxu0
        %v1652 = vadd.f32 0.0, %v1651
        %v1653 = vpop.f32.mrb[0].mxu0
        %1654 = vdwg.mxu0
        %v1655 = vld [vmem:[%s12] sm:$0x1]
        %v1657 = vlaneseq
        %v1658 = vshrl.u32 %v1657, 7
        %v1659 = vsub.s32 0, %v1658
        %v1660 = vrot.slane %v1655, %v1659
        %v1662 = vmul.f32 %v1625, %v1660
        %v1663 = vmul.f32 %v1628, %v1660
        %v1664 = vmul.f32 %v1633, %v1660
        %v1665 = vmul.f32 %v1636, %v1660
        %v1666 = vmul.f32 %v1641, %v1660
        %v1667 = vmul.f32 %v1644, %v1660
        %v1668 = vmul.f32 %v1649, %v1660
        %v1669 = vmul.f32 %v1652, %v1660
        %v1670 = vld [vmem:[%s13] sm:$0x1]
        %v1672 = vlaneseq
        %v1673 = vshrl.u32 %v1672, 7
        %v1674 = vsub.s32 0, %v1673
        %v1675 = vrot.slane %v1670, %v1674
        %v1677 = vadd.f32 %v1662, %v1675
        %v1678 = vadd.f32 %v1663, %v1675
        %v1679 = vadd.f32 %v1664, %v1675
        %v1680 = vadd.f32 %v1665, %v1675
        %v1681 = vadd.f32 %v1666, %v1675
        %v1682 = vadd.f32 %v1667, %v1675
        %v1683 = vadd.f32 %v1668, %v1675
        %v1684 = vadd.f32 %v1669, %v1675
        %v1685 = vadd.f32 %v1677, %v467
        %v1686 = vadd.f32 %v1678, %v468
        %v1687 = vadd.f32 %v1679, %v469
        %v1688 = vadd.f32 %v1680, %v470
        %v1689 = vadd.f32 %v1681, %v471
        %v1690 = vadd.f32 %v1682, %v472
        %v1691 = vadd.f32 %v1683, %v473
        %v1692 = vadd.f32 %v1684, %v474
        %v1693 = vmax.f32 %v1685, 0.0
        %v1694 = vmax.f32 %v1686, 0.0
        %v1695 = vmax.f32 %v1687, 0.0
        %v1696 = vmax.f32 %v1688, 0.0
        %v1697 = vmax.f32 %v1689, 0.0
        %v1698 = vmax.f32 %v1690, 0.0
        %v1699 = vmax.f32 %v1691, 0.0
        %v1700 = vmax.f32 %v1692, 0.0
        %1701 = vst.msk [vmem:[%s460] sm:$0xff] %vm511, %v1693
        %1702 = vst.msk [vmem:[%s460 + $0x8] sm:$0xff] %vm511, %v1694
        %1703 = vst.msk [vmem:[%s460 + $0x10] sm:$0xff] %vm511, %v1695
        %1704 = vst.msk [vmem:[%s460 + $0x18] sm:$0xff] %vm511, %v1696
        %1705 = vst.msk [vmem:[%s460 + $0x20] sm:$0xff] %vm511, %v1697
        %1706 = vst.msk [vmem:[%s460 + $0x28] sm:$0xff] %vm511, %v1698
        %1707 = vst.msk [vmem:[%s460 + $0x30] sm:$0xff] %vm511, %v1699
        %1708 = vst.msk [vmem:[%s460 + $0x38] sm:$0xff] %vm511, %v1700
        %s1709 = sand.u32 %s335, 1
        %s1710 = scalar_lea.sflag [#allocation5], %s1709
        %s1711 = sand.u32 %s335, 1
        %s1712 = smul.addr %s1711, 64
        %s1713 = scalar_lea.vmem [#allocation4], %s1712
        // Predicated region
        $region77: #{tpu_custom_call.1} parent=75 // pred_check
          %p1714 = pneg %p345
        $region78: #{tpu_custom_call.1} parent=75 // pred_check_branch
          %1716 = sbr.rel (%p1714) target = $region80
        $region79: #{tpu_custom_call.1} parent=75 // pred_region
          %s1718 = ssub.s32 1024, 1024
          %1719 = vsyncadd %s1710, %s1718
          %s1720 = smul.addr %s28, 8
          %s1721 = smul.addr %s1720, 128
          %s1722 = scalar_lea.hbm %s14, %s1721
          %s1723 = sshll.u32 %s1713, 4
          %s1724 = int_to_ptr.vmem [resolvable:$true] %s1723
          %1729 = dma.vmem_to_hbm [thread:$0]  %s1724, 1024, %s1722, %s1710, 128, 128, 8
        $region80: #{tpu_custom_call.1} parent=75 // pred_fallthru
          _
      $region76: #{tpu_custom_call.1} parent=5 // pred_fallthru
        _
      %p1730 = scmp.le.s32.totalorder 2, %s23
      // Predicated region
      $region81: #{tpu_custom_call.1} parent=5 // pred_check
        %p1731 = pneg %p1730
      $region82: #{tpu_custom_call.1} parent=5 // pred_check_branch
        %1733 = sbr.rel (%p1731) target = $region84
      $region83: #{tpu_custom_call.1} parent=5 // pred_region
        %s1734 = ssub.s32 %s23, 2
        // Predicated region
        $region85: #{tpu_custom_call.1} parent=83 // pred_check
          %p1735 = pneg %p351
        $region86: #{tpu_custom_call.1} parent=83 // pred_check_branch
          %1737 = sbr.rel (%p1735) target = $region88
        $region87: #{tpu_custom_call.1} parent=83 // pred_region
          %s1738 = sand.u32 %s336, 1
          %s1739 = scalar_lea.sflag [#allocation5], %s1738
          %s1740 = sand.u32 %s336, 1
          %s1741 = smul.addr %s1740, 64
          %s1742 = scalar_lea.vmem [#allocation4], %s1741
          %1743 = dma.done %s1739, 1024
        $region88: #{tpu_custom_call.1} parent=83 // pred_fallthru
          _
      $region84: #{tpu_custom_call.1} parent=5 // pred_fallthru
        _
    $region6: #{tpu_custom_call.1} parent=1 // loop_footer
      %s27 = sadd.s32 1, %s23
    $region7: #{tpu_custom_call.1} parent=1 // loop_footer_branch
      %22 = sbr.rel target = $region3
    $region8: #{tpu_custom_call.1} parent=1 // loop_exit
      _
    %1744 = vsyncpa [#allocation5], 1
    %s1745 = scalar_lea.sflag [#allocation5], 1
    %1746 = vsyncpa %s1745, 1

</llo_original>
